<compile_context>
chip_gen: v7x
topology: tpu7x:2x2x1
jax: 0.10.0
libtpu: 0.0.40
codegen_flags: <defaults>
</compile_context>

<pallas_src>
import functools

import jax
import jax.numpy as jnp
from jax.experimental import pallas as pl
from jax.experimental.pallas import tpu as pltpu

_LANE = 128


def _ru(n, m):
  return (n + m - 1) // m * m


def _pad2(a, rows=None, cols=None):
  r = a.shape[0] if rows is None else rows
  c = a.shape[1] if cols is None else cols
  return jnp.pad(a, ((0, r - a.shape[0]), (0, c - a.shape[1])))


# -----------------------------------------------------------------------------
# Per-graph fused kernel (one grid step == one graph)
# -----------------------------------------------------------------------------
def _gnn_graph_kernel(xin_ref, ea_ref, src_ref, dst_ref, dstr_ref,
                      w_h_ref, b_h_ref, w_e1_ref, b_e1_ref,
                      w_e2_ref, b_e2_ref, att_e_ref, w_srca_ref, bias_ref,
                      h0_ref, pooled_ref, *, hid):
  f32, bf16 = jnp.float32, jnp.bfloat16
  xin = xin_ref[0]          # (n_pb, in_dim_p)
  ea_in = ea_ref[0]         # (E_max, ea_dim_p)
  src = src_ref[0]          # (E_max, 1) int32 local index, -1 == padding
  dst = dst_ref[0]          # (E_max, 1)
  dstr = dstr_ref[0]        # (1, E_max)
  n = xin.shape[0]
  e = src.shape[0]
  dp = w_h_ref.shape[1]

  # ---- folded node encoder + x2h (single MXU pass) --------------------------
  h = jnp.maximum(
      jnp.dot(xin, w_h_ref[...], preferred_element_type=f32) + b_h_ref[...],
      0.0)

  # ---- edge encoder; lin_edge folded into the attention vector --------------
  ea = jnp.maximum(
      jnp.dot(ea_in, w_e1_ref[...], preferred_element_type=f32) + b_e1_ref[...],
      0.0)
  ea = jnp.maximum(
      jnp.dot(ea, w_e2_ref[...], preferred_element_type=f32) + b_e2_ref[...],
      0.0)
  a_e = jnp.dot(ea, att_e_ref[...], preferred_element_type=f32)     # (E,1)

  # ---- augmented lin_src projection ------------------------------------------
  # cols [0,hid): xs   col hid: a_src   col hid+1: 1.0 (denom)   col hid+2: a_dst
  xs_aug = jnp.dot(h, w_srca_ref[...], preferred_element_type=f32)  # (n, dp)
  col_i = jax.lax.broadcasted_iota(jnp.int32, (n, dp), 1)
  xs_aug = xs_aug + (col_i == hid + 1).astype(f32)                  # ones column
  a_d = xs_aug[:, hid + 2:hid + 3]                                  # (n, 1)

  # ---- local one-hot gather/scatter matrices (0/1 exact in bf16) ------------
  iota_en = jax.lax.broadcasted_iota(jnp.int32, (e, n), 1)
  gsrc = (src == iota_en).astype(bf16)                              # (E, n)
  gdst = (dst == iota_en).astype(f32)                               # (E, n)
  iota_ne = jax.lax.broadcasted_iota(jnp.int32, (n, e), 0)
  gdst_t = (iota_ne == dstr).astype(bf16)                           # (n, E)

  # source gather (bf16 MXU): also delivers a_src in column `hid`
  xs_src = jnp.dot(gsrc, xs_aug.astype(bf16), preferred_element_type=f32)
  coef_s = xs_src[:, hid:hid + 1]                                   # a_src[src]
  coef_d = jnp.dot(gdst, a_d, preferred_element_type=f32)           # a_dst[dst]

  # ---- attention logits, per-graph-block max softmax ------------------------
  logit = coef_s + coef_d + a_e
  logit = jnp.where(logit > 0, logit, 0.2 * logit)                  # LeakyReLU(0.2)
  logit = jnp.where(src >= 0, logit, -1e30)                         # mask padded edges
  m = jnp.max(logit, keepdims=True)                                 # (1,1) block max
  ex = jnp.exp(logit - m)                                           # (E,1)

  # destination scatter (bf16 MXU): cols [0,hid) -> numerator, col hid+1 -> denom
  scat = jnp.dot(gdst_t, (ex * xs_src).astype(bf16),
                 preferred_element_type=f32)                        # (n, dp)
  denom = scat[:, hid + 1:hid + 2]
  inv = pl.reciprocal(jnp.where(denom > 0.0, denom, 1.0), approx=True)
  out = scat * inv + bias_ref[...]                                  # cols >= hid: junk

  # ---- epilogue: h0 (local node 0) + exact mean pool -------------------------
  h0_ref[0] = out[0:1, :]
  pooled_ref[0] = jnp.sum(out, axis=0, keepdims=True) * (1.0 / n)


# -----------------------------------------------------------------------------
# Wrapper: host-side weight folds, per-graph edge bucketing, pallas_call
# -----------------------------------------------------------------------------
def gnn_forward(params, qa_emb, x, node_ids, node_types, node_scores,
                edge_index, edge_type, edge_attr, node2graph):
  del node_ids, edge_type  # unused by the reference forward
  f32 = jnp.float32
  bs = qa_emb.shape[0]
  n_nodes = x.shape[0]
  n_pb = n_nodes // bs
  cp_dim = x.shape[1]
  hid = params["gat_bias"].shape[1]
  dp = _ru(hid + 3, _LANE)           # 3 spare lanes: a_src / ones / a_dst folds

  # _working_graph: overwrite the first node of each graph with the QA emb
  qa_idx = jnp.arange(bs) * n_pb
  x = x.at[qa_idx].set(qa_emb)

  # node inputs: [x | node_types | node_scores] (encoder folded into x2h)
  xin = jnp.concatenate([x, node_types, node_scores], axis=-1)
  in_dim_p = _ru(xin.shape[1], _LANE)
  xin_b = _pad2(xin, cols=in_dim_p).reshape(bs, n_pb, in_dim_p)

  # per-graph edge bucketing, padded to a static E_max, local node indices
  E = edge_index.shape[1]
  E_max = _ru(E, 16)
  # TODO(synk): E_max is the total-edge worst case; at scale pass a per-graph
  # cap and replace this O(E^2) rank computation with a sort-based bucketing.
  src = edge_index[0].astype(jnp.int32)
  dst = edge_index[1].astype(jnp.int32)
  n2g = node2graph.astype(jnp.int32)
  g_e = n2g[dst]                                       # graph of each edge
  eidx = jnp.arange(E, dtype=jnp.int32)
  rank = jnp.sum((g_e[None, :] == g_e[:, None]) &
                 (eidx[None, :] < eidx[:, None]), axis=1)
  src_b = jnp.full((bs, E_max), -1, jnp.int32).at[g_e, rank].set(src - g_e * n_pb)
  dst_b = jnp.full((bs, E_max), -1, jnp.int32).at[g_e, rank].set(dst - g_e * n_pb)
  ea_dim_p = _ru(edge_attr.shape[1], _LANE)
  ea_b = jnp.zeros((bs, E_max, ea_dim_p), f32).at[g_e, rank].set(
      _pad2(edge_attr.astype(f32), cols=ea_dim_p))
  src_b3 = src_b[:, :, None]
  dst_b3 = dst_b[:, :, None]
  dstr_b3 = dst_b[:, None, :]

  # ---- host-side exact weight folds -----------------------------------------
  w_x2h_x = params["w_x2h"][:cp_dim]
  w_x2h_e = params["w_x2h"][cp_dim:]
  w_h = jnp.concatenate([w_x2h_x, params["w_nte"] @ w_x2h_e], axis=0)
  b_h = params["b_nte"] @ w_x2h_e + params["b_x2h"]
  att_e_fold = params["w_edge"] @ params["att_edge"]            # (hid, 1)
  w_src_aug = jnp.concatenate(
      [params["w_src"],
       params["w_src"] @ params["att_src"],                     # col hid   : a_src
       jnp.zeros((hid, 1), f32),                                # col hid+1 : ones
       params["w_src"] @ params["att_dst"]], axis=1)            # col hid+2 : a_dst

  w_h_p = _pad2(w_h, rows=in_dim_p, cols=dp)
  b_h_p = _pad2(b_h, cols=dp)
  w_e1_p = _pad2(params["w_e1"], rows=ea_dim_p, cols=dp)
  b_e1_p = _pad2(params["b_e1"], cols=dp)
  w_e2_p = _pad2(params["w_e2"], rows=dp, cols=dp)
  b_e2_p = _pad2(params["b_e2"], cols=dp)
  att_e_p = _pad2(att_e_fold, rows=dp)
  w_srca_p = _pad2(w_src_aug, rows=dp, cols=dp)
  bias_p = _pad2(params["gat_bias"], cols=dp)

  operands = (xin_b, ea_b, src_b3, dst_b3, dstr_b3,
              w_h_p, b_h_p, w_e1_p, b_e1_p, w_e2_p, b_e2_p,
              att_e_p, w_srca_p, bias_p)
  per_graph = {0, 1, 2, 3, 4}          # operands blocked along the graph axis
  in_specs = []
  for i, op in enumerate(operands):
    if i in per_graph:
      in_specs.append(pl.BlockSpec(
          (1,) + op.shape[1:], lambda b, nd=op.ndim: (b,) + (0,) * (nd - 1)))
    else:                              # weights: constant block -> stays resident
      in_specs.append(pl.BlockSpec(
          op.shape, lambda b, nd=op.ndim: (0,) * nd))

  out_spec_h0 = pl.BlockSpec((1, 1, dp), lambda b: (b, 0, 0))
  out_spec_pool = pl.BlockSpec((1, 1, dp), lambda b: (b, 0, 0))

  # per-generation scoped-VMEM budget (v5e/v6e: 128 MiB phys, v7x: 64 MiB)
  try:
    cap = int(pltpu.get_tpu_info().vmem_capacity_bytes)
  except Exception:
    cap = 64 * 1024 * 1024
  vmem_limit = min(max(cap // 2, 32 * 1024 * 1024), cap - 8 * 1024 * 1024)

  h0_p, pooled_p = pl.pallas_call(
      functools.partial(_gnn_graph_kernel, hid=hid),
      out_shape=(jax.ShapeDtypeStruct((bs, 1, dp), f32),
                 jax.ShapeDtypeStruct((bs, 1, dp), f32)),
      grid_spec=pltpu.PrefetchScalarGridSpec(
          num_scalar_prefetch=0,
          grid=(bs,),
          in_specs=in_specs,
          out_specs=(out_spec_h0, out_spec_pool)),
      compiler_params=pltpu.CompilerParams(
          dimension_semantics=("parallel",),
          vmem_limit_bytes=vmem_limit),
  )(*operands)

  return h0_p[:, 0, :hid], pooled_p[:, 0, :hid]


# -----------------------------------------------------------------------------
# Pure-jnp reference (general formulation, no per-graph blocking) — cross-check
# -----------------------------------------------------------------------------
def gnn_reference(params, qa_emb, x, node_ids, node_types, node_scores,
                  edge_index, edge_type, edge_attr, node2graph):
  bs = qa_emb.shape[0]
  n_nodes = x.shape[0]
  n_pb = n_nodes // bs
  qa_idx = jnp.arange(bs) * n_pb
  x = x.at[qa_idx].set(qa_emb)
  tn = jnp.concatenate([node_types, node_scores], axis=-1)
  x_extras = tn @ params["w_nte"] + params["b_nte"]
  h = jnp.maximum(jnp.concatenate([x, x_extras], -1) @ params["w_x2h"]
                  + params["b_x2h"], 0.0)
  ea = jnp.maximum(edge_attr @ params["w_e1"] + params["b_e1"], 0.0)
  ea = jnp.maximum(ea @ params["w_e2"] + params["b_e2"], 0.0)
  xs = h @ params["w_src"]
  eat = ea @ params["w_edge"]
  src, dst = edge_index[0], edge_index[1]
  a_s = (xs @ params["att_src"])[:, 0]
  a_d = (xs @ params["att_dst"])[:, 0]
  a_e = (eat @ params["att_edge"])[:, 0]
  logit = a_s[src] + a_d[dst] + a_e
  logit = jnp.where(logit > 0, logit, 0.2 * logit)
  gdst = (dst[:, None] == jnp.arange(n_nodes)[None, :]).astype(jnp.float32)
  att = jnp.where(gdst.T > 0.5, logit[None, :], -1e30)
  m = jnp.max(att, -1, keepdims=True)
  p = jnp.exp(att - m) * gdst.T
  denom = jnp.maximum(jnp.sum(p, -1, keepdims=True), 1e-30)
  out = (p @ xs[src]) / denom + params["gat_bias"]
  h0 = out[qa_idx]
  pool_mat = (jnp.arange(bs)[:, None] == node2graph[None, :]).astype(jnp.float32)
  pooled = (pool_mat @ out) / jnp.sum(pool_mat, -1, keepdims=True)
  return h0, pooled


# -----------------------------------------------------------------------------
if __name__ == "__main__":
  bs, n_nodes_pb = 2, 8
  n_nodes = bs * n_nodes_pb
  cp_dim, hid_dim = 32, 32
  n_ntype, n_etype = 4, 3
  n_edges = 24
  edge_attr_dim = n_ntype + n_etype + n_ntype  # 11

  key = jax.random.PRNGKey(0)
  ks = iter(jax.random.split(key, 32))
  rnd = lambda shape, s=0.1: s * jax.random.normal(next(ks), shape, jnp.float32)

  # parameters (weights stored pre-transposed as (in, out))
  params = {
      "w_nte": rnd((n_ntype + 1, hid_dim // 2)),
      "b_nte": rnd((1, hid_dim // 2)),
      "w_x2h": rnd((cp_dim + hid_dim // 2, hid_dim)),
      "b_x2h": rnd((1, hid_dim)),
      "w_e1": rnd((edge_attr_dim, hid_dim)),
      "b_e1": rnd((1, hid_dim)),
      "w_e2": rnd((hid_dim, hid_dim)),
      "b_e2": rnd((1, hid_dim)),
      "w_src": rnd((hid_dim, hid_dim)),      # GATConv.lin_src (no bias)
      "w_edge": rnd((hid_dim, hid_dim)),     # GATConv.lin_edge (no bias)
      "att_src": rnd((hid_dim, 1)),
      "att_dst": rnd((hid_dim, 1)),
      "att_edge": rnd((hid_dim, 1)),
      "gat_bias": rnd((1, hid_dim)),
  }

  # inputs (within-graph edges, as produced by PyG disjoint-graph batching)
  qa_emb = rnd((bs, cp_dim), 1.0)
  x = rnd((n_nodes, cp_dim), 1.0)
  node_ids = jnp.arange(n_nodes, dtype=jnp.int32)                 # unused in fwd
  ntype_idx = jax.random.randint(next(ks), (n_nodes,), 0, n_ntype)
  node_types = jax.nn.one_hot(ntype_idx, n_ntype, dtype=jnp.float32)
  node_scores = rnd((n_nodes, 1), 1.0)
  e_graph = jax.random.randint(next(ks), (n_edges,), 0, bs, dtype=jnp.int32)
  e_src = jax.random.randint(next(ks), (n_edges,), 0, n_nodes_pb, dtype=jnp.int32)
  e_dst = jax.random.randint(next(ks), (n_edges,), 0, n_nodes_pb, dtype=jnp.int32)
  edge_index = jnp.stack([e_graph * n_nodes_pb + e_src,
                          e_graph * n_nodes_pb + e_dst]).astype(jnp.int32)
  edge_type = jax.random.randint(next(ks), (n_edges,), 0, n_etype,
                                 dtype=jnp.int32)                 # unused in fwd
  edge_attr = rnd((n_edges, edge_attr_dim), 1.0)
  node2graph = jnp.repeat(jnp.arange(bs, dtype=jnp.int32), n_nodes_pb)

  h0, pooled_h = gnn_forward(params, qa_emb, x, node_ids, node_types,
                             node_scores, edge_index, edge_type, edge_attr,
                             node2graph)
  jax.block_until_ready((h0, pooled_h))

  h0_ref, pooled_ref = gnn_reference(params, qa_emb, x, node_ids, node_types,
                                     node_scores, edge_index, edge_type,
                                     edge_attr, node2graph)
  assert h0.shape == (bs, hid_dim) and pooled_h.shape == (bs, hid_dim)
  # tolerance covers the bf16 gather/scatter path and the EUP approximate
  # reciprocal used only for the softmax denominator (pool mean is exact).
  assert jnp.allclose(h0, h0_ref, atol=1e-2, rtol=1e-2)
  assert jnp.allclose(pooled_h, pooled_ref, atol=1e-2, rtol=1e-2)
  print("KERNEL_OK")
</pallas_src>

<mosaic_0001>
module attributes {stable_mosaic.version = 11 : i64} {
  func.func @_gnn_graph_kernel(%arg0: i32, %arg1: memref<1x8x128xf32, #tpu.memory_space<vmem>>, %arg2: memref<1x32x128xf32, #tpu.memory_space<vmem>>, %arg3: memref<1x32x1xi32, #tpu.memory_space<vmem>>, %arg4: memref<1x32x1xi32, #tpu.memory_space<vmem>>, %arg5: memref<1x1x32xi32, #tpu.memory_space<vmem>>, %arg6: memref<128x128xf32, #tpu.memory_space<vmem>>, %arg7: memref<1x128xf32, #tpu.memory_space<vmem>>, %arg8: memref<128x128xf32, #tpu.memory_space<vmem>>, %arg9: memref<1x128xf32, #tpu.memory_space<vmem>>, %arg10: memref<128x128xf32, #tpu.memory_space<vmem>>, %arg11: memref<1x128xf32, #tpu.memory_space<vmem>>, %arg12: memref<128x1xf32, #tpu.memory_space<vmem>>, %arg13: memref<128x128xf32, #tpu.memory_space<vmem>>, %arg14: memref<1x128xf32, #tpu.memory_space<vmem>>, %arg15: memref<1x1x128xf32, #tpu.memory_space<vmem>>, %arg16: memref<1x1x128xf32, #tpu.memory_space<vmem>>) attributes {dimension_semantics = [#tpu.dimension_semantics<parallel>], iteration_bounds = array<i64: 2>, scalar_prefetch = 0 : i64, scratch_operands = 0 : i64, tpu.core_type = #tpu.core_type<tc>, window_params = [{transform_indices = @transform_0, window_bounds = array<i64: 1, 8, 128>}, {transform_indices = @transform_1, window_bounds = array<i64: 1, 32, 128>}, {transform_indices = @transform_2, window_bounds = array<i64: 1, 32, 1>}, {transform_indices = @transform_3, window_bounds = array<i64: 1, 32, 1>}, {transform_indices = @transform_4, window_bounds = array<i64: 1, 1, 32>}, {pipeline_mode = #tpu.pipeline_mode<synchronous>, transform_indices = @transform_5, window_bounds = array<i64: 128, 128>}, {pipeline_mode = #tpu.pipeline_mode<synchronous>, transform_indices = @transform_6, window_bounds = array<i64: 1, 128>}, {pipeline_mode = #tpu.pipeline_mode<synchronous>, transform_indices = @transform_7, window_bounds = array<i64: 128, 128>}, {pipeline_mode = #tpu.pipeline_mode<synchronous>, transform_indices = @transform_8, window_bounds = array<i64: 1, 128>}, {pipeline_mode = #tpu.pipeline_mode<synchronous>, transform_indices = @transform_9, window_bounds = array<i64: 128, 128>}, {pipeline_mode = #tpu.pipeline_mode<synchronous>, transform_indices = @transform_10, window_bounds = array<i64: 1, 128>}, {pipeline_mode = #tpu.pipeline_mode<synchronous>, transform_indices = @transform_11, window_bounds = array<i64: 128, 1>}, {pipeline_mode = #tpu.pipeline_mode<synchronous>, transform_indices = @transform_12, window_bounds = array<i64: 128, 128>}, {pipeline_mode = #tpu.pipeline_mode<synchronous>, transform_indices = @transform_13, window_bounds = array<i64: 1, 128>}, {transform_indices = @transform_14, window_bounds = array<i64: 1, 1, 128>}, {transform_indices = @transform_15, window_bounds = array<i64: 1, 1, 128>}]} {
    %c0 = arith.constant 0 : index
    %c0_0 = arith.constant 0 : index
    %c0_1 = arith.constant 0 : index
    %0 = vector.load %arg1[%c0, %c0_0, %c0_1] : memref<1x8x128xf32, #tpu.memory_space<vmem>>, vector<1x8x128xf32>
    %1 = vector.shape_cast %0 : vector<1x8x128xf32> to vector<8x128xf32>
    %c0_2 = arith.constant 0 : index
    %c0_3 = arith.constant 0 : index
    %c0_4 = arith.constant 0 : index
    %2 = vector.load %arg2[%c0_2, %c0_3, %c0_4] : memref<1x32x128xf32, #tpu.memory_space<vmem>>, vector<1x32x128xf32>
    %3 = vector.shape_cast %2 : vector<1x32x128xf32> to vector<32x128xf32>
    %c0_5 = arith.constant 0 : index
    %c0_6 = arith.constant 0 : index
    %c0_7 = arith.constant 0 : index
    %4 = vector.load %arg3[%c0_5, %c0_6, %c0_7] : memref<1x32x1xi32, #tpu.memory_space<vmem>>, vector<1x32x1xi32>
    %5 = vector.shape_cast %4 : vector<1x32x1xi32> to vector<32x1xi32>
    %c0_8 = arith.constant 0 : index
    %c0_9 = arith.constant 0 : index
    %c0_10 = arith.constant 0 : index
    %6 = vector.load %arg4[%c0_8, %c0_9, %c0_10] : memref<1x32x1xi32, #tpu.memory_space<vmem>>, vector<1x32x1xi32>
    %7 = vector.shape_cast %6 : vector<1x32x1xi32> to vector<32x1xi32>
    %c0_11 = arith.constant 0 : index
    %c0_12 = arith.constant 0 : index
    %c0_13 = arith.constant 0 : index
    %8 = vector.load %arg5[%c0_11, %c0_12, %c0_13] : memref<1x1x32xi32, #tpu.memory_space<vmem>>, vector<1x1x32xi32>
    %9 = vector.shape_cast %8 : vector<1x1x32xi32> to vector<1x32xi32>
    %c0_14 = arith.constant 0 : index
    %c0_15 = arith.constant 0 : index
    %10 = vector.load %arg6[%c0_14, %c0_15] : memref<128x128xf32, #tpu.memory_space<vmem>>, vector<128x128xf32>
    %cst = arith.constant dense<0.000000e+00> : vector<8x128xf32>
    %11 = tpu.matmul %1, %10, %cst {dimension_numbers = #tpu.dot_dimension_numbers<[1], [0], [0], [1], [0, 0, 1, 1], [], []>} : vector<8x128xf32>, vector<128x128xf32>, vector<8x128xf32> -> vector<8x128xf32>
    %c0_16 = arith.constant 0 : index
    %c0_17 = arith.constant 0 : index
    %12 = vector.load %arg7[%c0_16, %c0_17] : memref<1x128xf32, #tpu.memory_space<vmem>>, vector<1x128xf32>
    %13 = vector.broadcast %12 : vector<1x128xf32> to vector<8x128xf32>
    %14 = arith.addf %11, %13 : vector<8x128xf32>
    %cst_18 = arith.constant 0.000000e+00 : f32
    %15 = vector.broadcast %cst_18 : f32 to vector<8x128xf32>
    %16 = arith.maximumf %14, %15 : vector<8x128xf32>
    %c0_19 = arith.constant 0 : index
    %c0_20 = arith.constant 0 : index
    %17 = vector.load %arg8[%c0_19, %c0_20] : memref<128x128xf32, #tpu.memory_space<vmem>>, vector<128x128xf32>
    %cst_21 = arith.constant dense<0.000000e+00> : vector<32x128xf32>
    %18 = tpu.matmul %3, %17, %cst_21 {dimension_numbers = #tpu.dot_dimension_numbers<[1], [0], [0], [1], [0, 0, 1, 1], [], []>} : vector<32x128xf32>, vector<128x128xf32>, vector<32x128xf32> -> vector<32x128xf32>
    %c0_22 = arith.constant 0 : index
    %c0_23 = arith.constant 0 : index
    %19 = vector.load %arg9[%c0_22, %c0_23] : memref<1x128xf32, #tpu.memory_space<vmem>>, vector<1x128xf32>
    %20 = vector.broadcast %19 : vector<1x128xf32> to vector<32x128xf32>
    %21 = arith.addf %18, %20 : vector<32x128xf32>
    %cst_24 = arith.constant 0.000000e+00 : f32
    %22 = vector.broadcast %cst_24 : f32 to vector<32x128xf32>
    %23 = arith.maximumf %21, %22 : vector<32x128xf32>
    %c0_25 = arith.constant 0 : index
    %c0_26 = arith.constant 0 : index
    %24 = vector.load %arg10[%c0_25, %c0_26] : memref<128x128xf32, #tpu.memory_space<vmem>>, vector<128x128xf32>
    %cst_27 = arith.constant dense<0.000000e+00> : vector<32x128xf32>
    %25 = tpu.matmul %23, %24, %cst_27 {dimension_numbers = #tpu.dot_dimension_numbers<[1], [0], [0], [1], [0, 0, 1, 1], [], []>} : vector<32x128xf32>, vector<128x128xf32>, vector<32x128xf32> -> vector<32x128xf32>
    %c0_28 = arith.constant 0 : index
    %c0_29 = arith.constant 0 : index
    %26 = vector.load %arg11[%c0_28, %c0_29] : memref<1x128xf32, #tpu.memory_space<vmem>>, vector<1x128xf32>
    %27 = vector.broadcast %26 : vector<1x128xf32> to vector<32x128xf32>
    %28 = arith.addf %25, %27 : vector<32x128xf32>
    %cst_30 = arith.constant 0.000000e+00 : f32
    %29 = vector.broadcast %cst_30 : f32 to vector<32x128xf32>
    %30 = arith.maximumf %28, %29 : vector<32x128xf32>
    %c0_31 = arith.constant 0 : index
    %c0_32 = arith.constant 0 : index
    %31 = vector.load %arg12[%c0_31, %c0_32] : memref<128x1xf32, #tpu.memory_space<vmem>>, vector<128x1xf32>
    %cst_33 = arith.constant dense<0.000000e+00> : vector<32x1xf32>
    %32 = tpu.matmul %30, %31, %cst_33 {dimension_numbers = #tpu.dot_dimension_numbers<[1], [0], [0], [1], [0, 0, 1, 1], [], []>} : vector<32x128xf32>, vector<128x1xf32>, vector<32x1xf32> -> vector<32x1xf32>
    %c0_34 = arith.constant 0 : index
    %c0_35 = arith.constant 0 : index
    %33 = vector.load %arg13[%c0_34, %c0_35] : memref<128x128xf32, #tpu.memory_space<vmem>>, vector<128x128xf32>
    %cst_36 = arith.constant dense<0.000000e+00> : vector<8x128xf32>
    %34 = tpu.matmul %16, %33, %cst_36 {dimension_numbers = #tpu.dot_dimension_numbers<[1], [0], [0], [1], [0, 0, 1, 1], [], []>} : vector<8x128xf32>, vector<128x128xf32>, vector<8x128xf32> -> vector<8x128xf32>
    %35 = tpu.iota {dimensions = array<i32: 1>} : vector<8x128xi32>
    %c33_i32 = arith.constant 33 : i32
    %36 = vector.broadcast %c33_i32 : i32 to vector<8x128xi32>
    %37 = arith.cmpi eq, %35, %36 : vector<8x128xi32>
    %38 = arith.extui %37 : vector<8x128xi1> to vector<8x128xi32>
    %39 = arith.sitofp %38 : vector<8x128xi32> to vector<8x128xf32>
    %40 = arith.addf %34, %39 : vector<8x128xf32>
    %41 = vector.extract_strided_slice %40 {offsets = [0, 34], sizes = [8, 1], strides = [1, 1]} : vector<8x128xf32> to vector<8x1xf32>
    %42 = tpu.iota {dimensions = array<i32: 1>} : vector<32x8xi32>
    %43 = vector.broadcast %5 : vector<32x1xi32> to vector<32x8xi32>
    %44 = arith.cmpi eq, %43, %42 : vector<32x8xi32>
    %45 = arith.extui %44 : vector<32x8xi1> to vector<32x8xi32>
    %46 = arith.sitofp %45 : vector<32x8xi32> to vector<32x8xf32>
    %47 = arith.truncf %46 : vector<32x8xf32> to vector<32x8xbf16>
    %48 = vector.broadcast %7 : vector<32x1xi32> to vector<32x8xi32>
    %49 = arith.cmpi eq, %48, %42 : vector<32x8xi32>
    %50 = arith.extui %49 : vector<32x8xi1> to vector<32x8xi32>
    %51 = arith.sitofp %50 : vector<32x8xi32> to vector<32x8xf32>
    %52 = tpu.iota {dimensions = array<i32: 0>} : vector<8x32xi32>
    %53 = vector.broadcast %9 : vector<1x32xi32> to vector<8x32xi32>
    %54 = arith.cmpi eq, %52, %53 : vector<8x32xi32>
    %55 = arith.extui %54 : vector<8x32xi1> to vector<8x32xi32>
    %56 = arith.sitofp %55 : vector<8x32xi32> to vector<8x32xf32>
    %57 = arith.truncf %56 : vector<8x32xf32> to vector<8x32xbf16>
    %58 = arith.truncf %40 : vector<8x128xf32> to vector<8x128xbf16>
    %cst_37 = arith.constant dense<0.000000e+00> : vector<32x128xf32>
    %59 = tpu.matmul %47, %58, %cst_37 {dimension_numbers = #tpu.dot_dimension_numbers<[1], [0], [0], [1], [0, 0, 1, 1], [], []>} : vector<32x8xbf16>, vector<8x128xbf16>, vector<32x128xf32> -> vector<32x128xf32>
    %60 = vector.extract_strided_slice %59 {offsets = [0, 32], sizes = [32, 1], strides = [1, 1]} : vector<32x128xf32> to vector<32x1xf32>
    %cst_38 = arith.constant dense<0.000000e+00> : vector<32x1xf32>
    %61 = tpu.matmul %51, %41, %cst_38 {dimension_numbers = #tpu.dot_dimension_numbers<[1], [0], [0], [1], [0, 0, 1, 1], [], []>} : vector<32x8xf32>, vector<8x1xf32>, vector<32x1xf32> -> vector<32x1xf32>
    %62 = arith.addf %60, %61 : vector<32x1xf32>
    %63 = arith.addf %62, %32 : vector<32x1xf32>
    %cst_39 = arith.constant 0.000000e+00 : f32
    %64 = vector.broadcast %cst_39 : f32 to vector<32x1xf32>
    %65 = arith.cmpf ogt, %63, %64 : vector<32x1xf32>
    %cst_40 = arith.constant 2.000000e-01 : f32
    %66 = vector.broadcast %cst_40 : f32 to vector<32x1xf32>
    %67 = arith.mulf %66, %63 : vector<32x1xf32>
    %68 = arith.select %65, %63, %67 : vector<32x1xi1>, vector<32x1xf32>
    %c0_i32 = arith.constant 0 : i32
    %69 = vector.broadcast %c0_i32 : i32 to vector<32x1xi32>
    %70 = arith.cmpi sge, %5, %69 : vector<32x1xi32>
    %cst_41 = arith.constant -1.000000e+30 : f32
    %71 = vector.broadcast %cst_41 : f32 to vector<32x1xf32>
    %72 = arith.select %70, %68, %71 : vector<32x1xi1>, vector<32x1xf32>
    %73 = vector.shape_cast %72 : vector<32x1xf32> to vector<1x32x1xf32>
    %cst_42 = arith.constant dense<0xFF800000> : vector<1xf32>
    %74 = vector.multi_reduction <maximumf>, %73, %cst_42 [1, 2] : vector<1x32x1xf32> to vector<1xf32>
    %75 = vector.shape_cast %74 : vector<1xf32> to vector<1x1x1xf32>
    %76 = vector.extract %75[0, 0, 0] : f32 from vector<1x1x1xf32>
    %77 = vector.broadcast %76 : f32 to vector<1x1xf32>
    %78 = vector.broadcast %77 : vector<1x1xf32> to vector<32x1xf32>
    %79 = arith.subf %72, %78 : vector<32x1xf32>
    %80 = math.exp %79 : vector<32x1xf32>
    %81 = vector.broadcast %80 : vector<32x1xf32> to vector<32x128xf32>
    %82 = arith.mulf %81, %59 : vector<32x128xf32>
    %83 = arith.truncf %82 : vector<32x128xf32> to vector<32x128xbf16>
    %cst_43 = arith.constant dense<0.000000e+00> : vector<8x128xf32>
    %84 = tpu.matmul %57, %83, %cst_43 {dimension_numbers = #tpu.dot_dimension_numbers<[1], [0], [0], [1], [0, 0, 1, 1], [], []>} : vector<8x32xbf16>, vector<32x128xbf16>, vector<8x128xf32> -> vector<8x128xf32>
    %85 = vector.extract_strided_slice %84 {offsets = [0, 33], sizes = [8, 1], strides = [1, 1]} : vector<8x128xf32> to vector<8x1xf32>
    %cst_44 = arith.constant 0.000000e+00 : f32
    %86 = vector.broadcast %cst_44 : f32 to vector<8x1xf32>
    %87 = arith.cmpf ogt, %85, %86 : vector<8x1xf32>
    %cst_45 = arith.constant 1.000000e+00 : f32
    %88 = vector.broadcast %cst_45 : f32 to vector<8x1xf32>
    %89 = arith.select %87, %85, %88 : vector<8x1xi1>, vector<8x1xf32>
    %90 = tpu.reciprocal %89 {approx = true} : vector<8x1xf32> -> vector<8x1xf32>
    %91 = vector.broadcast %90 : vector<8x1xf32> to vector<8x128xf32>
    %92 = arith.mulf %84, %91 : vector<8x128xf32>
    %c0_46 = arith.constant 0 : index
    %c0_47 = arith.constant 0 : index
    %93 = vector.load %arg14[%c0_46, %c0_47] : memref<1x128xf32, #tpu.memory_space<vmem>>, vector<1x128xf32>
    %94 = vector.broadcast %93 : vector<1x128xf32> to vector<8x128xf32>
    %95 = arith.addf %92, %94 : vector<8x128xf32>
    %96 = vector.extract_strided_slice %95 {offsets = [0, 0], sizes = [1, 128], strides = [1, 1]} : vector<8x128xf32> to vector<1x128xf32>
    %c0_48 = arith.constant 0 : index
    %c0_49 = arith.constant 0 : index
    %c0_50 = arith.constant 0 : index
    %97 = vector.load %arg15[%c0_48, %c0_49, %c0_50] : memref<1x1x128xf32, #tpu.memory_space<vmem>>, vector<1x1x128xf32>
    %98 = vector.shape_cast %97 : vector<1x1x128xf32> to vector<1x128xf32>
    %99 = vector.shape_cast %96 : vector<1x128xf32> to vector<1x1x128xf32>
    tpu.vector_store %arg15[%c0_48, %c0_49, %c0_50], %99 {strides = array<i32>} : memref<1x1x128xf32, #tpu.memory_space<vmem>>, vector<1x1x128xf32>,
    %cst_51 = arith.constant dense<0.000000e+00> : vector<128xf32>
    %100 = vector.multi_reduction <add>, %95, %cst_51 [0] : vector<8x128xf32> to vector<128xf32>
    %101 = vector.shape_cast %100 : vector<128xf32> to vector<1x128xf32>
    %cst_52 = arith.constant 1.250000e-01 : f32
    %102 = vector.broadcast %cst_52 : f32 to vector<1x128xf32>
    %103 = arith.mulf %101, %102 : vector<1x128xf32>
    %c0_53 = arith.constant 0 : index
    %c0_54 = arith.constant 0 : index
    %c0_55 = arith.constant 0 : index
    %104 = vector.load %arg16[%c0_53, %c0_54, %c0_55] : memref<1x1x128xf32, #tpu.memory_space<vmem>>, vector<1x1x128xf32>
    %105 = vector.shape_cast %104 : vector<1x1x128xf32> to vector<1x128xf32>
    %106 = vector.shape_cast %103 : vector<1x128xf32> to vector<1x1x128xf32>
    tpu.vector_store %arg16[%c0_53, %c0_54, %c0_55], %106 {strides = array<i32>} : memref<1x1x128xf32, #tpu.memory_space<vmem>>, vector<1x1x128xf32>,
    return
  }
  func.func @transform_0(%arg0: i32) -> (i32, i32, i32) {
    %c0_i32 = arith.constant 0 : i32
    %c0_i32_0 = arith.constant 0 : i32
    %c0_i32_1 = arith.constant 0 : i32
    return %arg0, %c0_i32, %c0_i32_0 : i32, i32, i32
  }
  func.func @transform_1(%arg0: i32) -> (i32, i32, i32) {
    %c0_i32 = arith.constant 0 : i32
    %c0_i32_0 = arith.constant 0 : i32
    %c0_i32_1 = arith.constant 0 : i32
    return %arg0, %c0_i32, %c0_i32_0 : i32, i32, i32
  }
  func.func @transform_2(%arg0: i32) -> (i32, i32, i32) {
    %c0_i32 = arith.constant 0 : i32
    %c0_i32_0 = arith.constant 0 : i32
    %c0_i32_1 = arith.constant 0 : i32
    return %arg0, %c0_i32, %c0_i32_0 : i32, i32, i32
  }
  func.func @transform_3(%arg0: i32) -> (i32, i32, i32) {
    %c0_i32 = arith.constant 0 : i32
    %c0_i32_0 = arith.constant 0 : i32
    %c0_i32_1 = arith.constant 0 : i32
    return %arg0, %c0_i32, %c0_i32_0 : i32, i32, i32
  }
  func.func @transform_4(%arg0: i32) -> (i32, i32, i32) {
    %c0_i32 = arith.constant 0 : i32
    %c0_i32_0 = arith.constant 0 : i32
    %c0_i32_1 = arith.constant 0 : i32
    return %arg0, %c0_i32, %c0_i32_0 : i32, i32, i32
  }
  func.func @transform_5(%arg0: i32) -> (i32, i32) {
    %c0_i32 = arith.constant 0 : i32
    %c0_i32_0 = arith.constant 0 : i32
    %c0_i32_1 = arith.constant 0 : i32
    return %c0_i32, %c0_i32_0 : i32, i32
  }
  func.func @transform_6(%arg0: i32) -> (i32, i32) {
    %c0_i32 = arith.constant 0 : i32
    %c0_i32_0 = arith.constant 0 : i32
    %c0_i32_1 = arith.constant 0 : i32
    return %c0_i32, %c0_i32_0 : i32, i32
  }
  func.func @transform_7(%arg0: i32) -> (i32, i32) {
    %c0_i32 = arith.constant 0 : i32
    %c0_i32_0 = arith.constant 0 : i32
    %c0_i32_1 = arith.constant 0 : i32
    return %c0_i32, %c0_i32_0 : i32, i32
  }
  func.func @transform_8(%arg0: i32) -> (i32, i32) {
    %c0_i32 = arith.constant 0 : i32
    %c0_i32_0 = arith.constant 0 : i32
    %c0_i32_1 = arith.constant 0 : i32
    return %c0_i32, %c0_i32_0 : i32, i32
  }
  func.func @transform_9(%arg0: i32) -> (i32, i32) {
    %c0_i32 = arith.constant 0 : i32
    %c0_i32_0 = arith.constant 0 : i32
    %c0_i32_1 = arith.constant 0 : i32
    return %c0_i32, %c0_i32_0 : i32, i32
  }
  func.func @transform_10(%arg0: i32) -> (i32, i32) {
    %c0_i32 = arith.constant 0 : i32
    %c0_i32_0 = arith.constant 0 : i32
    %c0_i32_1 = arith.constant 0 : i32
    return %c0_i32, %c0_i32_0 : i32, i32
  }
  func.func @transform_11(%arg0: i32) -> (i32, i32) {
    %c0_i32 = arith.constant 0 : i32
    %c0_i32_0 = arith.constant 0 : i32
    %c0_i32_1 = arith.constant 0 : i32
    return %c0_i32, %c0_i32_0 : i32, i32
  }
  func.func @transform_12(%arg0: i32) -> (i32, i32) {
    %c0_i32 = arith.constant 0 : i32
    %c0_i32_0 = arith.constant 0 : i32
    %c0_i32_1 = arith.constant 0 : i32
    return %c0_i32, %c0_i32_0 : i32, i32
  }
  func.func @transform_13(%arg0: i32) -> (i32, i32) {
    %c0_i32 = arith.constant 0 : i32
    %c0_i32_0 = arith.constant 0 : i32
    %c0_i32_1 = arith.constant 0 : i32
    return %c0_i32, %c0_i32_0 : i32, i32
  }
  func.func @transform_14(%arg0: i32) -> (i32, i32, i32) {
    %c0_i32 = arith.constant 0 : i32
    %c0_i32_0 = arith.constant 0 : i32
    %c0_i32_1 = arith.constant 0 : i32
    return %arg0, %c0_i32, %c0_i32_0 : i32, i32, i32
  }
  func.func @transform_15(%arg0: i32) -> (i32, i32, i32) {
    %c0_i32 = arith.constant 0 : i32
    %c0_i32_0 = arith.constant 0 : i32
    %c0_i32_1 = arith.constant 0 : i32
    return %arg0, %c0_i32, %c0_i32_0 : i32, i32, i32
  }
}

</mosaic_0001>

<llo_original>
// kernel: tpu_custom_call.1
$region0: #{tpu_custom_call.1}
  #allocation0 [shape = 'u32[]', space=smem, size = 0x4, offset = 0x4, fixed_abs, tag = 'smem constant byte address 0x4 - core index']
  #allocation1 [shape = 'u32[144,128]{1,0:T(1,128)}', space=vmem, size = 0x12000, scoped, tag = 'internal scratch']
  %s0 = inlined_call_operand.hbm [shape: f32[2,8,128], index: 0, kind: input, shape index: {}]
  %s1 = inlined_call_operand.hbm [shape: f32[2,32,128], index: 1, kind: input, shape index: {}]
  %s2 = inlined_call_operand.vmem [shape: s32[2,32,1], index: 2, kind: input, shape index: {}]
  %s3 = inlined_call_operand.vmem [shape: s32[2,32,1], index: 3, kind: input, shape index: {}]
  %s4 = inlined_call_operand.vmem [shape: s32[2,1,32], index: 4, kind: input, shape index: {}]
  %s5 = inlined_call_operand.vmem [shape: f32[128,128], index: 5, kind: input, shape index: {}]
  %s6 = inlined_call_operand.vmem [shape: f32[1,128], index: 6, kind: input, shape index: {}]
  %s7 = inlined_call_operand.vmem [shape: f32[128,128], index: 7, kind: input, shape index: {}]
  %s8 = inlined_call_operand.vmem [shape: f32[1,128], index: 8, kind: input, shape index: {}]
  %s9 = inlined_call_operand.hbm [shape: f32[128,128], index: 9, kind: input, shape index: {}]
  %s10 = inlined_call_operand.vmem [shape: f32[1,128], index: 10, kind: input, shape index: {}]
  %s11 = inlined_call_operand.vmem [shape: f32[128,1], index: 11, kind: input, shape index: {}]
  %s12 = inlined_call_operand.hbm [shape: f32[128,128], index: 12, kind: input, shape index: {}]
  %s13 = inlined_call_operand.vmem [shape: f32[1,128], index: 13, kind: input, shape index: {}]
  %s14 = inlined_call_operand.hbm [shape: f32[2,1,128], index: 14, kind: output, shape index: {0}]
  %s15 = inlined_call_operand.hbm [shape: f32[2,1,128], index: 15, kind: output, shape index: {1}]
  %16 = xla_tuple %s14, %s15
  %s17 = sld [smem:[#allocation0]]
  $region113: #{tpu_custom_call.1} parent=0
    _
  %s19 = ssub.s32 1, %s17
  %s20 = scalar_select 0, %s19, %s17
  $region1: #{tpu_custom_call.1} parent=0
    #allocation2 [shape = 'u8[8192]{0}', space=vmem, size = 0x2000, scoped, tag = 'input window, operand 0']
    #allocation3 [shape = 's32[2]{0}', space=sflag, size = 0x8, scoped, tag = 'scoped memory for tpu_custom_call.1']
    #allocation4 [shape = 's32[2]{0}', space=sflag, size = 0x8, scoped, tag = 'scoped memory for tpu_custom_call.1']
    #allocation5 [shape = 'u8[32768]{0}', space=vmem, size = 0x8000, scoped, tag = 'input window, operand 1']
    #allocation6 [shape = 's32[2]{0}', space=sflag, size = 0x8, scoped, tag = 'scoped memory for tpu_custom_call.1']
    #allocation7 [shape = 'u8[65536]{0}', space=vmem, size = 0x10000, scoped, tag = 'input window, operand 9, single buffered']
    #allocation8 [shape = 'u8[65536]{0}', space=vmem, size = 0x10000, scoped, tag = 'input window, operand 12, single buffered']
    #allocation9 [shape = 's32[1]{0}', space=sflag, size = 0x4, scoped, tag = 'scoped memory for tpu_custom_call.1']
    #allocation10 [shape = 'u8[1024]{0}', space=vmem, size = 0x400, scoped, tag = 'output window, operand 0']
    #allocation11 [shape = 'u8[1024]{0}', space=vmem, size = 0x400, scoped, tag = 'output window, operand 1']
    #allocation12 [shape = 's32[2]{0}', space=sflag, size = 0x8, scoped, tag = 'scoped memory for tpu_custom_call.1']
    %21 = vsyncpa [#allocation3], 0
    %s22 = scalar_lea.sflag [#allocation3], 1
    %23 = vsyncpa %s22, 0
    %24 = vsyncpa [#allocation6], 0
    %s25 = scalar_lea.sflag [#allocation6], 1
    %26 = vsyncpa %s25, 0
    %27 = vsyncpa [#allocation9], 0
    %28 = vsyncpa [#allocation4], 0
    %s29 = scalar_lea.sflag [#allocation4], 1
    %30 = vsyncpa %s29, 0
    %31 = vsyncpa [#allocation12], 0
    %s32 = scalar_lea.sflag [#allocation12], 1
    %33 = vsyncpa %s32, 0
    loop: start=0, step=1, limit=4
    $region2: #{tpu_custom_call.1} parent=1 // loop_pre_header
      _
    $region3: #{tpu_custom_call.1} parent=1 // loop_header
      %s35 = sphi 0, %s39
      %p36 = scmp.ge.s32.totalorder %s35, 4
      %s45 = sphi 0, %s47
      %s48 = sphi 0, %s45
      %s49 = sphi 0, %s48
      %s65 = sphi 0, %s49
      %s71 = sphi 0, %s73
      %s74 = sphi 0, %s71
      %s75 = sphi 0, %s74
      %s91 = sphi 0, %s75
      %s97 = sphi 0, %s99
      %s100 = sphi 0, %s97
      %s101 = sphi 0, %s100
      %s117 = sphi 0, %s101
      %s123 = sphi 0, %s125
      %s126 = sphi 0, %s123
      %s127 = sphi 0, %s126
      %s143 = sphi 0, %s127
      %s149 = sphi 0, %s151
      %s152 = sphi 0, %s149
      %s153 = sphi 0, %s152
      %s169 = sphi 0, %s153
      %s173 = sphi 0, %s173
      %s175 = sphi 0, %s173
      %s176 = sphi 0, %s175
      %s190 = sphi 0, %s176
      %s194 = sphi 0, %s194
      %s196 = sphi 0, %s194
      %s197 = sphi 0, %s196
      %s211 = sphi 0, %s197
      %s215 = sphi 0, %s215
      %s217 = sphi 0, %s215
      %s218 = sphi 0, %s217
      %s232 = sphi 0, %s218
      %s236 = sphi 0, %s236
      %s238 = sphi 0, %s236
      %s239 = sphi 0, %s238
      %s253 = sphi 0, %s239
      %s257 = sphi 0, %s257
      %s259 = sphi 0, %s257
      %s260 = sphi 0, %s259
      %s274 = sphi 0, %s260
      %s278 = sphi 0, %s278
      %s280 = sphi 0, %s278
      %s281 = sphi 0, %s280
      %s295 = sphi 0, %s281
      %s299 = sphi 0, %s299
      %s301 = sphi 0, %s299
      %s302 = sphi 0, %s301
      %s316 = sphi 0, %s302
      %s320 = sphi 0, %s320
      %s322 = sphi 0, %s320
      %s323 = sphi 0, %s322
      %s337 = sphi 0, %s323
      %s341 = sphi 0, %s341
      %s343 = sphi 0, %s341
      %s344 = sphi 0, %s343
      %s358 = sphi 0, %s344
      %s364 = sphi 0, %s366
      %s367 = sphi 0, %s364
      %s368 = sphi 0, %s367
      %s384 = sphi 0, %s368
      %s390 = sphi 0, %s392
      %s393 = sphi 0, %s390
      %s394 = sphi 0, %s393
      %s410 = sphi 0, %s394
    $region4: #{tpu_custom_call.1} parent=1 // loop_header_branch
      %38 = sbr.rel (%p36) target = $region8
    $region5: #{tpu_custom_call.1} parent=1 // loop_body
      %s40 = ssub.s32 %s35, 1
      %s41 = ssub.s32 %s35, 2
      %s42 = sadd.s32 %s35, 1
      %s43 = ssub.s32 %s35, %s42
      %p44 = scmp.eq.s32.totalorder %s43, 0
      %s46 = sadd.s32 %s45, 1
      %s47 = scalar_select %p44, %s45, %s46
      %p50 = pneg %p44
      %p51 = scmp.eq.s32.totalorder %s35, 1
      %p52 = por %p50, %p51
      %p53 = scmp.ne.s32.totalorder %s45, %s48
      %p54 = scmp.eq.s32.totalorder %s35, 0
      %p55 = por %p53, %p54
      %p56 = scmp.ne.s32.totalorder %s45, %s48
      %p57 = scmp.eq.s32.totalorder %s40, 1
      %p58 = por %p56, %p57
      %p59 = scmp.ne.s32.totalorder %s48, %s49
      %p60 = scmp.eq.s32.totalorder %s40, 0
      %p61 = por %p59, %p60
      %p62 = scmp.ne.s32.totalorder %s48, %s49
      %p63 = scmp.eq.s32.totalorder %s41, 1
      %p64 = por %p62, %p63
      %p66 = scmp.ne.s32.totalorder %s49, %s65
      %p67 = scmp.eq.s32.totalorder %s41, 0
      %p68 = por %p66, %p67
      %s69 = ssub.s32 %s35, %s42
      %p70 = scmp.eq.s32.totalorder %s69, 0
      %s72 = sadd.s32 %s71, 1
      %s73 = scalar_select %p70, %s71, %s72
      %p76 = pneg %p70
      %p77 = scmp.eq.s32.totalorder %s35, 1
      %p78 = por %p76, %p77
      %p79 = scmp.ne.s32.totalorder %s71, %s74
      %p80 = scmp.eq.s32.totalorder %s35, 0
      %p81 = por %p79, %p80
      %p82 = scmp.ne.s32.totalorder %s71, %s74
      %p83 = scmp.eq.s32.totalorder %s40, 1
      %p84 = por %p82, %p83
      %p85 = scmp.ne.s32.totalorder %s74, %s75
      %p86 = scmp.eq.s32.totalorder %s40, 0
      %p87 = por %p85, %p86
      %p88 = scmp.ne.s32.totalorder %s74, %s75
      %p89 = scmp.eq.s32.totalorder %s41, 1
      %p90 = por %p88, %p89
      %p92 = scmp.ne.s32.totalorder %s75, %s91
      %p93 = scmp.eq.s32.totalorder %s41, 0
      %p94 = por %p92, %p93
      %s95 = ssub.s32 %s35, %s42
      %p96 = scmp.eq.s32.totalorder %s95, 0
      %s98 = sadd.s32 %s97, 1
      %s99 = scalar_select %p96, %s97, %s98
      %p102 = pneg %p96
      %p103 = scmp.eq.s32.totalorder %s35, 1
      %p104 = por %p102, %p103
      %p105 = scmp.ne.s32.totalorder %s97, %s100
      %p106 = scmp.eq.s32.totalorder %s35, 0
      %p107 = por %p105, %p106
      %p108 = scmp.ne.s32.totalorder %s97, %s100
      %p109 = scmp.eq.s32.totalorder %s40, 1
      %p110 = por %p108, %p109
      %p111 = scmp.ne.s32.totalorder %s100, %s101
      %p112 = scmp.eq.s32.totalorder %s40, 0
      %p113 = por %p111, %p112
      %p114 = scmp.ne.s32.totalorder %s100, %s101
      %p115 = scmp.eq.s32.totalorder %s41, 1
      %p116 = por %p114, %p115
      %p118 = scmp.ne.s32.totalorder %s101, %s117
      %p119 = scmp.eq.s32.totalorder %s41, 0
      %p120 = por %p118, %p119
      %s121 = ssub.s32 %s35, %s42
      %p122 = scmp.eq.s32.totalorder %s121, 0
      %s124 = sadd.s32 %s123, 1
      %s125 = scalar_select %p122, %s123, %s124
      %p128 = pneg %p122
      %p129 = scmp.eq.s32.totalorder %s35, 1
      %p130 = por %p128, %p129
      %p131 = scmp.ne.s32.totalorder %s123, %s126
      %p132 = scmp.eq.s32.totalorder %s35, 0
      %p133 = por %p131, %p132
      %p134 = scmp.ne.s32.totalorder %s123, %s126
      %p135 = scmp.eq.s32.totalorder %s40, 1
      %p136 = por %p134, %p135
      %p137 = scmp.ne.s32.totalorder %s126, %s127
      %p138 = scmp.eq.s32.totalorder %s40, 0
      %p139 = por %p137, %p138
      %p140 = scmp.ne.s32.totalorder %s126, %s127
      %p141 = scmp.eq.s32.totalorder %s41, 1
      %p142 = por %p140, %p141
      %p144 = scmp.ne.s32.totalorder %s127, %s143
      %p145 = scmp.eq.s32.totalorder %s41, 0
      %p146 = por %p144, %p145
      %s147 = ssub.s32 %s35, %s42
      %p148 = scmp.eq.s32.totalorder %s147, 0
      %s150 = sadd.s32 %s149, 1
      %s151 = scalar_select %p148, %s149, %s150
      %p154 = pneg %p148
      %p155 = scmp.eq.s32.totalorder %s35, 1
      %p156 = por %p154, %p155
      %p157 = scmp.ne.s32.totalorder %s149, %s152
      %p158 = scmp.eq.s32.totalorder %s35, 0
      %p159 = por %p157, %p158
      %p160 = scmp.ne.s32.totalorder %s149, %s152
      %p161 = scmp.eq.s32.totalorder %s40, 1
      %p162 = por %p160, %p161
      %p163 = scmp.ne.s32.totalorder %s152, %s153
      %p164 = scmp.eq.s32.totalorder %s40, 0
      %p165 = por %p163, %p164
      %p166 = scmp.ne.s32.totalorder %s152, %s153
      %p167 = scmp.eq.s32.totalorder %s41, 1
      %p168 = por %p166, %p167
      %p170 = scmp.ne.s32.totalorder %s153, %s169
      %p171 = scmp.eq.s32.totalorder %s41, 0
      %p172 = por %p170, %p171
      %s174 = sadd.s32 %s173, 1
      %p177 = scmp.eq.s32.totalorder %s35, 1
      %p178 = scmp.ne.s32.totalorder %s173, %s175
      %p179 = scmp.eq.s32.totalorder %s35, 0
      %p180 = por %p178, %p179
      %p181 = scmp.ne.s32.totalorder %s173, %s175
      %p182 = scmp.eq.s32.totalorder %s40, 1
      %p183 = por %p181, %p182
      %p184 = scmp.ne.s32.totalorder %s175, %s176
      %p185 = scmp.eq.s32.totalorder %s40, 0
      %p186 = por %p184, %p185
      %p187 = scmp.ne.s32.totalorder %s175, %s176
      %p188 = scmp.eq.s32.totalorder %s41, 1
      %p189 = por %p187, %p188
      %p191 = scmp.ne.s32.totalorder %s176, %s190
      %p192 = scmp.eq.s32.totalorder %s41, 0
      %p193 = por %p191, %p192
      %s195 = sadd.s32 %s194, 1
      %p198 = scmp.eq.s32.totalorder %s35, 1
      %p199 = scmp.ne.s32.totalorder %s194, %s196
      %p200 = scmp.eq.s32.totalorder %s35, 0
      %p201 = por %p199, %p200
      %p202 = scmp.ne.s32.totalorder %s194, %s196
      %p203 = scmp.eq.s32.totalorder %s40, 1
      %p204 = por %p202, %p203
      %p205 = scmp.ne.s32.totalorder %s196, %s197
      %p206 = scmp.eq.s32.totalorder %s40, 0
      %p207 = por %p205, %p206
      %p208 = scmp.ne.s32.totalorder %s196, %s197
      %p209 = scmp.eq.s32.totalorder %s41, 1
      %p210 = por %p208, %p209
      %p212 = scmp.ne.s32.totalorder %s197, %s211
      %p213 = scmp.eq.s32.totalorder %s41, 0
      %p214 = por %p212, %p213
      %s216 = sadd.s32 %s215, 1
      %p219 = scmp.eq.s32.totalorder %s35, 1
      %p220 = scmp.ne.s32.totalorder %s215, %s217
      %p221 = scmp.eq.s32.totalorder %s35, 0
      %p222 = por %p220, %p221
      %p223 = scmp.ne.s32.totalorder %s215, %s217
      %p224 = scmp.eq.s32.totalorder %s40, 1
      %p225 = por %p223, %p224
      %p226 = scmp.ne.s32.totalorder %s217, %s218
      %p227 = scmp.eq.s32.totalorder %s40, 0
      %p228 = por %p226, %p227
      %p229 = scmp.ne.s32.totalorder %s217, %s218
      %p230 = scmp.eq.s32.totalorder %s41, 1
      %p231 = por %p229, %p230
      %p233 = scmp.ne.s32.totalorder %s218, %s232
      %p234 = scmp.eq.s32.totalorder %s41, 0
      %p235 = por %p233, %p234
      %s237 = sadd.s32 %s236, 1
      %p240 = scmp.eq.s32.totalorder %s35, 1
      %p241 = scmp.ne.s32.totalorder %s236, %s238
      %p242 = scmp.eq.s32.totalorder %s35, 0
      %p243 = por %p241, %p242
      %p244 = scmp.ne.s32.totalorder %s236, %s238
      %p245 = scmp.eq.s32.totalorder %s40, 1
      %p246 = por %p244, %p245
      %p247 = scmp.ne.s32.totalorder %s238, %s239
      %p248 = scmp.eq.s32.totalorder %s40, 0
      %p249 = por %p247, %p248
      %p250 = scmp.ne.s32.totalorder %s238, %s239
      %p251 = scmp.eq.s32.totalorder %s41, 1
      %p252 = por %p250, %p251
      %p254 = scmp.ne.s32.totalorder %s239, %s253
      %p255 = scmp.eq.s32.totalorder %s41, 0
      %p256 = por %p254, %p255
      %s258 = sadd.s32 %s257, 1
      %p261 = scmp.eq.s32.totalorder %s35, 1
      %p262 = scmp.ne.s32.totalorder %s257, %s259
      %p263 = scmp.eq.s32.totalorder %s35, 0
      %p264 = por %p262, %p263
      %p265 = scmp.ne.s32.totalorder %s257, %s259
      %p266 = scmp.eq.s32.totalorder %s40, 1
      %p267 = por %p265, %p266
      %p268 = scmp.ne.s32.totalorder %s259, %s260
      %p269 = scmp.eq.s32.totalorder %s40, 0
      %p270 = por %p268, %p269
      %p271 = scmp.ne.s32.totalorder %s259, %s260
      %p272 = scmp.eq.s32.totalorder %s41, 1
      %p273 = por %p271, %p272
      %p275 = scmp.ne.s32.totalorder %s260, %s274
      %p276 = scmp.eq.s32.totalorder %s41, 0
      %p277 = por %p275, %p276
      %s279 = sadd.s32 %s278, 1
      %p282 = scmp.eq.s32.totalorder %s35, 1
      %p283 = scmp.ne.s32.totalorder %s278, %s280
      %p284 = scmp.eq.s32.totalorder %s35, 0
      %p285 = por %p283, %p284
      %p286 = scmp.ne.s32.totalorder %s278, %s280
      %p287 = scmp.eq.s32.totalorder %s40, 1
      %p288 = por %p286, %p287
      %p289 = scmp.ne.s32.totalorder %s280, %s281
      %p290 = scmp.eq.s32.totalorder %s40, 0
      %p291 = por %p289, %p290
      %p292 = scmp.ne.s32.totalorder %s280, %s281
      %p293 = scmp.eq.s32.totalorder %s41, 1
      %p294 = por %p292, %p293
      %p296 = scmp.ne.s32.totalorder %s281, %s295
      %p297 = scmp.eq.s32.totalorder %s41, 0
      %p298 = por %p296, %p297
      %s300 = sadd.s32 %s299, 1
      %p303 = scmp.eq.s32.totalorder %s35, 1
      %p304 = scmp.ne.s32.totalorder %s299, %s301
      %p305 = scmp.eq.s32.totalorder %s35, 0
      %p306 = por %p304, %p305
      %p307 = scmp.ne.s32.totalorder %s299, %s301
      %p308 = scmp.eq.s32.totalorder %s40, 1
      %p309 = por %p307, %p308
      %p310 = scmp.ne.s32.totalorder %s301, %s302
      %p311 = scmp.eq.s32.totalorder %s40, 0
      %p312 = por %p310, %p311
      %p313 = scmp.ne.s32.totalorder %s301, %s302
      %p314 = scmp.eq.s32.totalorder %s41, 1
      %p315 = por %p313, %p314
      %p317 = scmp.ne.s32.totalorder %s302, %s316
      %p318 = scmp.eq.s32.totalorder %s41, 0
      %p319 = por %p317, %p318
      %s321 = sadd.s32 %s320, 1
      %p324 = scmp.eq.s32.totalorder %s35, 1
      %p325 = scmp.ne.s32.totalorder %s320, %s322
      %p326 = scmp.eq.s32.totalorder %s35, 0
      %p327 = por %p325, %p326
      %p328 = scmp.ne.s32.totalorder %s320, %s322
      %p329 = scmp.eq.s32.totalorder %s40, 1
      %p330 = por %p328, %p329
      %p331 = scmp.ne.s32.totalorder %s322, %s323
      %p332 = scmp.eq.s32.totalorder %s40, 0
      %p333 = por %p331, %p332
      %p334 = scmp.ne.s32.totalorder %s322, %s323
      %p335 = scmp.eq.s32.totalorder %s41, 1
      %p336 = por %p334, %p335
      %p338 = scmp.ne.s32.totalorder %s323, %s337
      %p339 = scmp.eq.s32.totalorder %s41, 0
      %p340 = por %p338, %p339
      %s342 = sadd.s32 %s341, 1
      %p345 = scmp.eq.s32.totalorder %s35, 1
      %p346 = scmp.ne.s32.totalorder %s341, %s343
      %p347 = scmp.eq.s32.totalorder %s35, 0
      %p348 = por %p346, %p347
      %p349 = scmp.ne.s32.totalorder %s341, %s343
      %p350 = scmp.eq.s32.totalorder %s40, 1
      %p351 = por %p349, %p350
      %p352 = scmp.ne.s32.totalorder %s343, %s344
      %p353 = scmp.eq.s32.totalorder %s40, 0
      %p354 = por %p352, %p353
      %p355 = scmp.ne.s32.totalorder %s343, %s344
      %p356 = scmp.eq.s32.totalorder %s41, 1
      %p357 = por %p355, %p356
      %p359 = scmp.ne.s32.totalorder %s344, %s358
      %p360 = scmp.eq.s32.totalorder %s41, 0
      %p361 = por %p359, %p360
      %s362 = ssub.s32 %s35, %s42
      %p363 = scmp.eq.s32.totalorder %s362, 0
      %s365 = sadd.s32 %s364, 1
      %s366 = scalar_select %p363, %s364, %s365
      %p369 = pneg %p363
      %p370 = scmp.eq.s32.totalorder %s35, 1
      %p371 = por %p369, %p370
      %p372 = scmp.ne.s32.totalorder %s364, %s367
      %p373 = scmp.eq.s32.totalorder %s35, 0
      %p374 = por %p372, %p373
      %p375 = scmp.ne.s32.totalorder %s364, %s367
      %p376 = scmp.eq.s32.totalorder %s40, 1
      %p377 = por %p375, %p376
      %p378 = scmp.ne.s32.totalorder %s367, %s368
      %p379 = scmp.eq.s32.totalorder %s40, 0
      %p380 = por %p378, %p379
      %p381 = scmp.ne.s32.totalorder %s367, %s368
      %p382 = scmp.eq.s32.totalorder %s41, 1
      %p383 = por %p381, %p382
      %p385 = scmp.ne.s32.totalorder %s368, %s384
      %p386 = scmp.eq.s32.totalorder %s41, 0
      %p387 = por %p385, %p386
      %s388 = ssub.s32 %s35, %s42
      %p389 = scmp.eq.s32.totalorder %s388, 0
      %s391 = sadd.s32 %s390, 1
      %s392 = scalar_select %p389, %s390, %s391
      %p395 = pneg %p389
      %p396 = scmp.eq.s32.totalorder %s35, 1
      %p397 = por %p395, %p396
      %p398 = scmp.ne.s32.totalorder %s390, %s393
      %p399 = scmp.eq.s32.totalorder %s35, 0
      %p400 = por %p398, %p399
      %p401 = scmp.ne.s32.totalorder %s390, %s393
      %p402 = scmp.eq.s32.totalorder %s40, 1
      %p403 = por %p401, %p402
      %p404 = scmp.ne.s32.totalorder %s393, %s394
      %p405 = scmp.eq.s32.totalorder %s40, 0
      %p406 = por %p404, %p405
      %p407 = scmp.ne.s32.totalorder %s393, %s394
      %p408 = scmp.eq.s32.totalorder %s41, 1
      %p409 = por %p407, %p408
      %p411 = scmp.ne.s32.totalorder %s394, %s410
      %p412 = scmp.eq.s32.totalorder %s41, 0
      %p413 = por %p411, %p412
      %p414 = scmp.le.s32.totalorder 1, %s35
      %p415 = scmp.lt.s32.totalorder %s35, 3
      %p416 = pnand %p414, %p415
      %p417 = pneg %p416
      // Predicated region
      $region9: #{tpu_custom_call.1} parent=5 // pred_check
        _
      $region10: #{tpu_custom_call.1} parent=5 // pred_check_branch
        %419 = sbr.rel (%p416) target = $region12
      $region11: #{tpu_custom_call.1} parent=5 // pred_region
        %s420 = ssub.s32 %s35, 1
        // Predicated region
        $region13: #{tpu_custom_call.1} parent=11 // pred_check
          %p421 = pneg %p186
        $region14: #{tpu_custom_call.1} parent=11 // pred_check_branch
          %423 = sbr.rel (%p421) target = $region16
        $region15: #{tpu_custom_call.1} parent=11 // pred_region
          _
        $region16: #{tpu_custom_call.1} parent=11 // pred_fallthru
          _
        // Predicated region
        $region17: #{tpu_custom_call.1} parent=11 // pred_check
          %p424 = pneg %p207
        $region18: #{tpu_custom_call.1} parent=11 // pred_check_branch
          %426 = sbr.rel (%p424) target = $region20
        $region19: #{tpu_custom_call.1} parent=11 // pred_region
          _
        $region20: #{tpu_custom_call.1} parent=11 // pred_fallthru
          _
        // Predicated region
        $region21: #{tpu_custom_call.1} parent=11 // pred_check
          %p427 = pneg %p228
        $region22: #{tpu_custom_call.1} parent=11 // pred_check_branch
          %429 = sbr.rel (%p427) target = $region24
        $region23: #{tpu_custom_call.1} parent=11 // pred_region
          _
        $region24: #{tpu_custom_call.1} parent=11 // pred_fallthru
          _
        // Predicated region
        $region25: #{tpu_custom_call.1} parent=11 // pred_check
          %p430 = pneg %p249
        $region26: #{tpu_custom_call.1} parent=11 // pred_check_branch
          %432 = sbr.rel (%p430) target = $region28
        $region27: #{tpu_custom_call.1} parent=11 // pred_region
          _
        $region28: #{tpu_custom_call.1} parent=11 // pred_fallthru
          _
        // Predicated region
        $region29: #{tpu_custom_call.1} parent=11 // pred_check
          %p433 = pneg %p270
        $region30: #{tpu_custom_call.1} parent=11 // pred_check_branch
          %435 = sbr.rel (%p433) target = $region32
        $region31: #{tpu_custom_call.1} parent=11 // pred_region
          %s437 = ssub.s32 2048, 2048
          %438 = vsyncadd [#allocation6], %s437
          %s439 = sshll.u32 [#allocation7], 4
          %s440 = int_to_ptr.vmem [resolvable:$true] %s439
          %445 = dma.hbm_to_vmem [thread:$0]  %s9, 2048, %s440, [#allocation6], 128, 128, 8
        $region32: #{tpu_custom_call.1} parent=11 // pred_fallthru
          _
        // Predicated region
        $region33: #{tpu_custom_call.1} parent=11 // pred_check
          %p446 = pneg %p291
        $region34: #{tpu_custom_call.1} parent=11 // pred_check_branch
          %448 = sbr.rel (%p446) target = $region36
        $region35: #{tpu_custom_call.1} parent=11 // pred_region
          _
        $region36: #{tpu_custom_call.1} parent=11 // pred_fallthru
          _
        // Predicated region
        $region37: #{tpu_custom_call.1} parent=11 // pred_check
          %p449 = pneg %p312
        $region38: #{tpu_custom_call.1} parent=11 // pred_check_branch
          %451 = sbr.rel (%p449) target = $region40
        $region39: #{tpu_custom_call.1} parent=11 // pred_region
          _
        $region40: #{tpu_custom_call.1} parent=11 // pred_fallthru
          _
        // Predicated region
        $region41: #{tpu_custom_call.1} parent=11 // pred_check
          %p452 = pneg %p333
        $region42: #{tpu_custom_call.1} parent=11 // pred_check_branch
          %454 = sbr.rel (%p452) target = $region44
        $region43: #{tpu_custom_call.1} parent=11 // pred_region
          %s456 = ssub.s32 2048, 2048
          %457 = vsyncadd [#allocation9], %s456
          %s458 = sshll.u32 [#allocation8], 4
          %s459 = int_to_ptr.vmem [resolvable:$true] %s458
          %464 = dma.hbm_to_vmem [thread:$0]  %s12, 2048, %s459, [#allocation9], 128, 128, 8
        $region44: #{tpu_custom_call.1} parent=11 // pred_fallthru
          _
        // Predicated region
        $region45: #{tpu_custom_call.1} parent=11 // pred_check
          %p465 = pneg %p354
        $region46: #{tpu_custom_call.1} parent=11 // pred_check_branch
          %467 = sbr.rel (%p465) target = $region48
        $region47: #{tpu_custom_call.1} parent=11 // pred_region
          _
        $region48: #{tpu_custom_call.1} parent=11 // pred_fallthru
          _
      $region12: #{tpu_custom_call.1} parent=5 // pred_fallthru
        _
      %p468 = scmp.lt.s32.totalorder %s35, 2
      // Predicated region
      $region49: #{tpu_custom_call.1} parent=5 // pred_check
        %p469 = pneg %p468
      $region50: #{tpu_custom_call.1} parent=5 // pred_check_branch
        %471 = sbr.rel (%p469) target = $region52
      $region51: #{tpu_custom_call.1} parent=5 // pred_region
        // Predicated region
        $region53: #{tpu_custom_call.1} parent=51 // pred_check
          %p472 = pneg %p55
        $region54: #{tpu_custom_call.1} parent=51 // pred_check_branch
          %474 = sbr.rel (%p472) target = $region56
        $region55: #{tpu_custom_call.1} parent=51 // pred_region
          %s475 = sand.u32 %s45, 1
          %s476 = scalar_lea.sflag [#allocation3], %s475
          %s477 = sand.u32 %s45, 1
          %s478 = smul.addr %s477, 8
          %s479 = scalar_lea.vmem [#allocation2], %s478
          %s481 = ssub.s32 128, 128
          %482 = vsyncadd %s476, %s481
          %s483 = smul.addr %s35, 128
          %s484 = scalar_lea.hbm %s0, %s483
          %s486 = sshll.u32 %s479, 4
          %s487 = int_to_ptr.vmem [resolvable:$true] %s486
          %489 = dma.hbm_to_vmem [thread:$0]  %s484, 128, %s487, %s476
        $region56: #{tpu_custom_call.1} parent=51 // pred_fallthru
          _
        // Predicated region
        $region57: #{tpu_custom_call.1} parent=51 // pred_check
          %p490 = pneg %p81
        $region58: #{tpu_custom_call.1} parent=51 // pred_check_branch
          %492 = sbr.rel (%p490) target = $region60
        $region59: #{tpu_custom_call.1} parent=51 // pred_region
          %s493 = sand.u32 %s35, 1
          %s494 = scalar_lea.sflag [#allocation6], %s493
          %s495 = sand.u32 %s71, 1
          %s496 = smul.addr %s495, 32
          %s497 = scalar_lea.vmem [#allocation5], %s496
          %s499 = ssub.s32 512, 512
          %500 = vsyncadd %s494, %s499
          %s501 = smul.addr %s35, 4
          %s502 = smul.addr %s501, 128
          %s503 = scalar_lea.hbm %s1, %s502
          %s504 = sshll.u32 %s497, 4
          %s505 = int_to_ptr.vmem [resolvable:$true] %s504
          %510 = dma.hbm_to_vmem [thread:$0]  %s503, 512, %s505, %s494, 128, 128, 8
        $region60: #{tpu_custom_call.1} parent=51 // pred_fallthru
          _
        // Predicated region
        $region61: #{tpu_custom_call.1} parent=51 // pred_check
          %p511 = pneg %p107
        $region62: #{tpu_custom_call.1} parent=51 // pred_check_branch
          %513 = sbr.rel (%p511) target = $region64
        $region63: #{tpu_custom_call.1} parent=51 // pred_region
          %p514 = scmp.lt.s32.totalorder %s35, 1
          %s515 = scalar_select %p514, %s35, 1
          %s516 = smul.addr %s515, 4
          %s517 = smul.addr %s516, 8
          %s518 = scalar_lea.vmem %s2, %s517
        $region64: #{tpu_custom_call.1} parent=51 // pred_fallthru
          _
        // Predicated region
        $region65: #{tpu_custom_call.1} parent=51 // pred_check
          %p519 = pneg %p133
        $region66: #{tpu_custom_call.1} parent=51 // pred_check_branch
          %521 = sbr.rel (%p519) target = $region68
        $region67: #{tpu_custom_call.1} parent=51 // pred_region
          %p522 = scmp.lt.s32.totalorder %s35, 1
          %s523 = scalar_select %p522, %s35, 1
          %s524 = smul.addr %s523, 4
          %s525 = smul.addr %s524, 8
          %s526 = scalar_lea.vmem %s3, %s525
        $region68: #{tpu_custom_call.1} parent=51 // pred_fallthru
          _
        // Predicated region
        $region69: #{tpu_custom_call.1} parent=51 // pred_check
          %p527 = pneg %p159
        $region70: #{tpu_custom_call.1} parent=51 // pred_check_branch
          %529 = sbr.rel (%p527) target = $region72
        $region71: #{tpu_custom_call.1} parent=51 // pred_region
          %p530 = scmp.lt.s32.totalorder %s35, 1
          %s531 = scalar_select %p530, %s35, 1
          %s532 = scalar_lea.vmem %s4, %s531
        $region72: #{tpu_custom_call.1} parent=51 // pred_fallthru
          _
      $region52: #{tpu_custom_call.1} parent=5 // pred_fallthru
        _
      %p533 = scmp.le.s32.totalorder 1, %s35
      %p534 = scmp.lt.s32.totalorder %s35, 3
      %p535 = pnand %p533, %p534
      %p536 = pneg %p535
      // Predicated region
      $region73: #{tpu_custom_call.1} parent=5 // pred_check
        _
      $region74: #{tpu_custom_call.1} parent=5 // pred_check_branch
        %538 = sbr.rel (%p535) target = $region76
      $region75: #{tpu_custom_call.1} parent=5 // pred_region
        %s539 = ssub.s32 %s35, 1
        %s540 = sand.u32 %s48, 1
        %s541 = scalar_lea.sflag [#allocation3], %s540
        %s542 = sand.u32 %s48, 1
        %s543 = smul.addr %s542, 8
        %s544 = scalar_lea.vmem [#allocation2], %s543
        // Predicated region
        $region77: #{tpu_custom_call.1} parent=75 // pred_check
          %p545 = pneg %p61
        $region78: #{tpu_custom_call.1} parent=75 // pred_check_branch
          %547 = sbr.rel (%p545) target = $region80
        $region79: #{tpu_custom_call.1} parent=75 // pred_region
          %548 = dma.done %s541, 128
        $region80: #{tpu_custom_call.1} parent=75 // pred_fallthru
          _
        %s549 = sand.u32 %s40, 1
        %s550 = scalar_lea.sflag [#allocation6], %s549
        %s551 = sand.u32 %s74, 1
        %s552 = smul.addr %s551, 32
        %s553 = scalar_lea.vmem [#allocation5], %s552
        // Predicated region
        $region81: #{tpu_custom_call.1} parent=75 // pred_check
          %p554 = pneg %p87
        $region82: #{tpu_custom_call.1} parent=75 // pred_check_branch
          %556 = sbr.rel (%p554) target = $region84
        $region83: #{tpu_custom_call.1} parent=75 // pred_region
          %557 = dma.done %s550, 512
        $region84: #{tpu_custom_call.1} parent=75 // pred_fallthru
          _
        // Predicated region
        $region85: #{tpu_custom_call.1} parent=75 // pred_check
          %p558 = pneg %p270
        $region86: #{tpu_custom_call.1} parent=75 // pred_check_branch
          %560 = sbr.rel (%p558) target = $region88
        $region87: #{tpu_custom_call.1} parent=75 // pred_region
          %561 = dma.done [#allocation6], 2048
        $region88: #{tpu_custom_call.1} parent=75 // pred_fallthru
          _
        // Predicated region
        $region89: #{tpu_custom_call.1} parent=75 // pred_check
          %p562 = pneg %p333
        $region90: #{tpu_custom_call.1} parent=75 // pred_check_branch
          %564 = sbr.rel (%p562) target = $region92
        $region91: #{tpu_custom_call.1} parent=75 // pred_region
          %565 = dma.done [#allocation9], 2048
        $region92: #{tpu_custom_call.1} parent=75 // pred_fallthru
          _
        %s566 = sand.u32 %s48, 1
        %s567 = scalar_lea.sflag [#allocation3], %s566
        %s568 = sand.u32 %s48, 1
        %s569 = smul.addr %s568, 8
        %s570 = scalar_lea.vmem [#allocation2], %s569
        %p571 = pneg %p61
        %p572 = pneg %p58
        %s573 = sand.u32 %s40, 1
        %s574 = scalar_lea.sflag [#allocation6], %s573
        %s575 = sand.u32 %s74, 1
        %s576 = smul.addr %s575, 32
        %s577 = scalar_lea.vmem [#allocation5], %s576
        %p578 = pneg %p87
        %p579 = pneg %p84
        %p580 = scmp.lt.s32.totalorder %s40, 1
        %s581 = scalar_select %p580, %s40, 1
        %s582 = smul.addr %s581, 4
        %s583 = smul.addr %s582, 8
        %s584 = scalar_lea.vmem %s2, %s583
        %p585 = pneg %p113
        %p586 = pneg %p110
        %p587 = scmp.lt.s32.totalorder %s40, 1
        %s588 = scalar_select %p587, %s40, 1
        %s589 = smul.addr %s588, 4
        %s590 = smul.addr %s589, 8
        %s591 = scalar_lea.vmem %s3, %s590
        %p592 = pneg %p139
        %p593 = pneg %p136
        %p594 = scmp.lt.s32.totalorder %s40, 1
        %s595 = scalar_select %p594, %s40, 1
        %s596 = scalar_lea.vmem %s4, %s595
        %p597 = pneg %p165
        %p598 = pneg %p162
        %p599 = pneg %p186
        %p600 = pneg %p183
        %p601 = pneg %p207
        %p602 = pneg %p204
        %p603 = pneg %p228
        %p604 = pneg %p225
        %p605 = pneg %p249
        %p606 = pneg %p246
        %p607 = pneg %p270
        %p608 = pneg %p267
        %p609 = pneg %p291
        %p610 = pneg %p288
        %p611 = pneg %p312
        %p612 = pneg %p309
        %p613 = pneg %p333
        %p614 = pneg %p330
        %p615 = pneg %p354
        %p616 = pneg %p351
        %p617 = pneg %p380
        %p618 = pneg %p377
        %s619 = sand.u32 %s367, 1
        %s620 = scalar_lea.sflag [#allocation4], %s619
        %s621 = sand.u32 %s367, 1
        %s622 = scalar_lea.vmem [#allocation10], %s621
        %p623 = pneg %p406
        %p624 = pneg %p403
        %s625 = sand.u32 %s393, 1
        %s626 = scalar_lea.sflag [#allocation12], %s625
        %s627 = sand.u32 %s393, 1
        %s628 = scalar_lea.vmem [#allocation11], %s627
        %p629 = scmp.lt.s32.totalorder %s40, 1
        %s630 = scalar_select %p629, %s40, 1
        %s631 = smul.addr %s630, 4
        %s632 = smul.addr %s631, 8
        %s633 = scalar_lea.vmem %s2, %s632
        %p634 = scmp.lt.s32.totalorder %s40, 1
        %s635 = scalar_select %p634, %s40, 1
        %s636 = smul.addr %s635, 4
        %s637 = smul.addr %s636, 8
        %s638 = scalar_lea.vmem %s3, %s637
        %p639 = scmp.lt.s32.totalorder %s40, 1
        %s640 = scalar_select %p639, %s40, 1
        %s641 = scalar_lea.vmem %s4, %s640
        %v643 = vld [vmem:[%s544] sm:$0xff]
        %v644 = vld [vmem:[%s553] sm:$0xff]
        %v645 = vld [vmem:[%s553 + $0x8] sm:$0xff]
        %v646 = vld [vmem:[%s553 + $0x10] sm:$0xff]
        %v647 = vld [vmem:[%s553 + $0x18] sm:$0xff]
        %v648 = vld [vmem:[%s633] sm:$0xff]
        %v649 = vld [vmem:[%s633 + $0x8] sm:$0xff]
        %v650 = vld [vmem:[%s633 + $0x10] sm:$0xff]
        %v651 = vld [vmem:[%s633 + $0x18] sm:$0xff]
        %v652 = vld [vmem:[%s638] sm:$0xff]
        %v653 = vld [vmem:[%s638 + $0x8] sm:$0xff]
        %v654 = vld [vmem:[%s638 + $0x10] sm:$0xff]
        %v655 = vld [vmem:[%s638 + $0x18] sm:$0xff]
        %v656 = vld [vmem:[%s641] sm:$0x1]
        %v657 = vld [vmem:[%s5] sm:$0xff]
        %v658 = vld [vmem:[%s5 + $0x8] sm:$0xff]
        %v659 = vld [vmem:[%s5 + $0x10] sm:$0xff]
        %v660 = vld [vmem:[%s5 + $0x18] sm:$0xff]
        %v661 = vld [vmem:[%s5 + $0x20] sm:$0xff]
        %v662 = vld [vmem:[%s5 + $0x28] sm:$0xff]
        %v663 = vld [vmem:[%s5 + $0x30] sm:$0xff]
        %v664 = vld [vmem:[%s5 + $0x38] sm:$0xff]
        %v665 = vld [vmem:[%s5 + $0x40] sm:$0xff]
        %v666 = vld [vmem:[%s5 + $0x48] sm:$0xff]
        %v667 = vld [vmem:[%s5 + $0x50] sm:$0xff]
        %v668 = vld [vmem:[%s5 + $0x58] sm:$0xff]
        %v669 = vld [vmem:[%s5 + $0x60] sm:$0xff]
        %v670 = vld [vmem:[%s5 + $0x68] sm:$0xff]
        %v671 = vld [vmem:[%s5 + $0x70] sm:$0xff]
        %v672 = vld [vmem:[%s5 + $0x78] sm:$0xff]
        %v673 = vld [vmem:[%s6] sm:$0x1]
        %v675 = vlaneseq
        %v676 = vshrl.u32 %v675, 7
        %v677 = vsub.s32 0, %v676
        %v678 = vrot.slane %v673, %v677
        %680 = vmatprep.subr.mxu0 0.0
        %681 = vmatpush1.msra.mxu0 %v657
        %682 = vmatprep.subr.mxu0 0.0
        %683 = vmatpush1.msra.mxu0 %v658
        %684 = vmatprep.subr.mxu0 0.0
        %685 = vmatpush1.msra.mxu0 %v659
        %686 = vmatprep.subr.mxu0 0.0
        %687 = vmatpush1.msra.mxu0 %v660
        %688 = vmatprep.subr.mxu0 0.0
        %689 = vmatpush1.msra.mxu0 %v661
        %690 = vmatprep.subr.mxu0 0.0
        %691 = vmatpush1.msra.mxu0 %v662
        %692 = vmatprep.subr.mxu0 0.0
        %693 = vmatpush1.msra.mxu0 %v663
        %694 = vmatprep.subr.mxu0 0.0
        %695 = vmatpush1.msra.mxu0 %v664
        %696 = vmatprep.subr.mxu0 0.0
        %697 = vmatpush1.msra.mxu0 %v665
        %698 = vmatprep.subr.mxu0 0.0
        %699 = vmatpush1.msra.mxu0 %v666
        %700 = vmatprep.subr.mxu0 0.0
        %701 = vmatpush1.msra.mxu0 %v667
        %702 = vmatprep.subr.mxu0 0.0
        %703 = vmatpush1.msra.mxu0 %v668
        %704 = vmatprep.subr.mxu0 0.0
        %705 = vmatpush1.msra.mxu0 %v669
        %706 = vmatprep.subr.mxu0 0.0
        %707 = vmatpush1.msra.mxu0 %v670
        %708 = vmatprep.subr.mxu0 0.0
        %709 = vmatpush1.msra.mxu0 %v671
        %710 = vmatprep.subr.mxu0 0.0
        %711 = vmatpush1.msra.mxu0 %v672
        %712 = vmatprep.subr.mxu0 0.0
        %713 = vmatpush1.msra.mxu0 0.0
        %714 = vmatprep.subr.mxu0 0.0
        %715 = vmatpush1.msra.mxu0 0.0
        %716 = vmatprep.subr.mxu0 0.0
        %717 = vmatpush1.msra.mxu0 0.0
        %718 = vmatprep.subr.mxu0 0.0
        %719 = vmatpush1.msra.mxu0 0.0
        %720 = vmatprep.subr.mxu0 0.0
        %721 = vmatpush1.msra.mxu0 0.0
        %722 = vmatprep.subr.mxu0 0.0
        %723 = vmatpush1.msra.mxu0 0.0
        %724 = vmatprep.subr.mxu0 0.0
        %725 = vmatpush1.msra.mxu0 0.0
        %726 = vmatprep.subr.mxu0 0.0
        %727 = vmatpush1.msra.mxu0 0.0
        %728 = vmatprep.subr.mxu0 0.0
        %729 = vmatpush1.msra.mxu0 0.0
        %730 = vmatprep.subr.mxu0 0.0
        %731 = vmatpush1.msra.mxu0 0.0
        %732 = vmatprep.subr.mxu0 0.0
        %733 = vmatpush1.msra.mxu0 0.0
        %734 = vmatprep.subr.mxu0 0.0
        %735 = vmatpush1.msra.mxu0 0.0
        %736 = vmatprep.subr.mxu0 0.0
        %737 = vmatpush1.msra.mxu0 0.0
        %738 = vmatprep.subr.mxu0 0.0
        %739 = vmatpush1.msra.mxu0 0.0
        %740 = vmatprep.subr.mxu0 0.0
        %741 = vmatpush1.msra.mxu0 0.0
        %742 = vmatprep.subr.mxu0 0.0
        %743 = vmatpush1.msra.mxu0 0.0
        %744 = vmatprep.mubr.f32.mxu0 0.0
        %745 = vmatmul.mubr.f32.gmra.mrb[0].mxu0 %v643
        %v746 = vpop.f32.mrb[0].mxu0
        %v747 = vadd.f32 %v678, %v746
        %v748 = vpop.f32.mrb[0].mxu0
        %749 = vdwg.mxu0
        %v750 = vmax.f32 %v747, 0.0
        %v751 = vld [vmem:[%s7] sm:$0xff]
        %v752 = vld [vmem:[%s7 + $0x8] sm:$0xff]
        %v753 = vld [vmem:[%s7 + $0x10] sm:$0xff]
        %v754 = vld [vmem:[%s7 + $0x18] sm:$0xff]
        %v755 = vld [vmem:[%s7 + $0x20] sm:$0xff]
        %v756 = vld [vmem:[%s7 + $0x28] sm:$0xff]
        %v757 = vld [vmem:[%s7 + $0x30] sm:$0xff]
        %v758 = vld [vmem:[%s7 + $0x38] sm:$0xff]
        %v759 = vld [vmem:[%s7 + $0x40] sm:$0xff]
        %v760 = vld [vmem:[%s7 + $0x48] sm:$0xff]
        %v761 = vld [vmem:[%s7 + $0x50] sm:$0xff]
        %v762 = vld [vmem:[%s7 + $0x58] sm:$0xff]
        %v763 = vld [vmem:[%s7 + $0x60] sm:$0xff]
        %v764 = vld [vmem:[%s7 + $0x68] sm:$0xff]
        %v765 = vld [vmem:[%s7 + $0x70] sm:$0xff]
        %v766 = vld [vmem:[%s7 + $0x78] sm:$0xff]
        %v767 = vld [vmem:[%s8] sm:$0x1]
        %v769 = vlaneseq
        %v770 = vshrl.u32 %v769, 7
        %v771 = vsub.s32 0, %v770
        %v772 = vrot.slane %v767, %v771
        %774 = vmatprep.subr.mxu0 0.0
        %775 = vmatpush1.msra.mxu0 %v751
        %776 = vmatprep.subr.mxu0 0.0
        %777 = vmatpush1.msra.mxu0 %v752
        %778 = vmatprep.subr.mxu0 0.0
        %779 = vmatpush1.msra.mxu0 %v753
        %780 = vmatprep.subr.mxu0 0.0
        %781 = vmatpush1.msra.mxu0 %v754
        %782 = vmatprep.subr.mxu0 0.0
        %783 = vmatpush1.msra.mxu0 %v755
        %784 = vmatprep.subr.mxu0 0.0
        %785 = vmatpush1.msra.mxu0 %v756
        %786 = vmatprep.subr.mxu0 0.0
        %787 = vmatpush1.msra.mxu0 %v757
        %788 = vmatprep.subr.mxu0 0.0
        %789 = vmatpush1.msra.mxu0 %v758
        %790 = vmatprep.subr.mxu0 0.0
        %791 = vmatpush1.msra.mxu0 %v759
        %792 = vmatprep.subr.mxu0 0.0
        %793 = vmatpush1.msra.mxu0 %v760
        %794 = vmatprep.subr.mxu0 0.0
        %795 = vmatpush1.msra.mxu0 %v761
        %796 = vmatprep.subr.mxu0 0.0
        %797 = vmatpush1.msra.mxu0 %v762
        %798 = vmatprep.subr.mxu0 0.0
        %799 = vmatpush1.msra.mxu0 %v763
        %800 = vmatprep.subr.mxu0 0.0
        %801 = vmatpush1.msra.mxu0 %v764
        %802 = vmatprep.subr.mxu0 0.0
        %803 = vmatpush1.msra.mxu0 %v765
        %804 = vmatprep.subr.mxu0 0.0
        %805 = vmatpush1.msra.mxu0 %v766
        %806 = vmatprep.subr.mxu0 0.0
        %807 = vmatpush1.msra.mxu0 0.0
        %808 = vmatprep.subr.mxu0 0.0
        %809 = vmatpush1.msra.mxu0 0.0
        %810 = vmatprep.subr.mxu0 0.0
        %811 = vmatpush1.msra.mxu0 0.0
        %812 = vmatprep.subr.mxu0 0.0
        %813 = vmatpush1.msra.mxu0 0.0
        %814 = vmatprep.subr.mxu0 0.0
        %815 = vmatpush1.msra.mxu0 0.0
        %816 = vmatprep.subr.mxu0 0.0
        %817 = vmatpush1.msra.mxu0 0.0
        %818 = vmatprep.subr.mxu0 0.0
        %819 = vmatpush1.msra.mxu0 0.0
        %820 = vmatprep.subr.mxu0 0.0
        %821 = vmatpush1.msra.mxu0 0.0
        %822 = vmatprep.subr.mxu0 0.0
        %823 = vmatpush1.msra.mxu0 0.0
        %824 = vmatprep.subr.mxu0 0.0
        %825 = vmatpush1.msra.mxu0 0.0
        %826 = vmatprep.subr.mxu0 0.0
        %827 = vmatpush1.msra.mxu0 0.0
        %828 = vmatprep.subr.mxu0 0.0
        %829 = vmatpush1.msra.mxu0 0.0
        %830 = vmatprep.subr.mxu0 0.0
        %831 = vmatpush1.msra.mxu0 0.0
        %832 = vmatprep.subr.mxu0 0.0
        %833 = vmatpush1.msra.mxu0 0.0
        %834 = vmatprep.subr.mxu0 0.0
        %835 = vmatpush1.msra.mxu0 0.0
        %836 = vmatprep.subr.mxu0 0.0
        %837 = vmatpush1.msra.mxu0 0.0
        %838 = vmatprep.mubr.f32.mxu0 0.0
        %839 = vmatmul.mubr.f32.gmra.mrb[0].mxu0 %v644
        %v840 = vpop.f32.mrb[0].mxu0
        %v841 = vadd.f32 %v772, %v840
        %v842 = vpop.f32.mrb[0].mxu0
        %843 = vmatprep.mubr.f32.mxu0 0.0
        %844 = vmatmul.mubr.f32.gmra.mrb[0].mxu0 %v645
        %v845 = vpop.f32.mrb[0].mxu0
        %v846 = vadd.f32 %v772, %v845
        %v847 = vpop.f32.mrb[0].mxu0
        %848 = vmatprep.mubr.f32.mxu0 0.0
        %849 = vmatmul.mubr.f32.gmra.mrb[0].mxu0 %v646
        %v850 = vpop.f32.mrb[0].mxu0
        %v851 = vadd.f32 %v772, %v850
        %v852 = vpop.f32.mrb[0].mxu0
        %853 = vmatprep.mubr.f32.mxu0 0.0
        %854 = vmatmul.mubr.f32.gmra.mrb[0].mxu0 %v647
        %v855 = vpop.f32.mrb[0].mxu0
        %v856 = vadd.f32 %v772, %v855
        %v857 = vpop.f32.mrb[0].mxu0
        %858 = vdwg.mxu0
        %v859 = vmax.f32 %v841, 0.0
        %v860 = vmax.f32 %v846, 0.0
        %v861 = vmax.f32 %v851, 0.0
        %v862 = vmax.f32 %v856, 0.0
        %v863 = vld [vmem:[#allocation7] sm:$0xff]
        %v864 = vld [vmem:[#allocation7 + $0x8] sm:$0xff]
        %v865 = vld [vmem:[#allocation7 + $0x10] sm:$0xff]
        %v866 = vld [vmem:[#allocation7 + $0x18] sm:$0xff]
        %v867 = vld [vmem:[#allocation7 + $0x20] sm:$0xff]
        %v868 = vld [vmem:[#allocation7 + $0x28] sm:$0xff]
        %v869 = vld [vmem:[#allocation7 + $0x30] sm:$0xff]
        %v870 = vld [vmem:[#allocation7 + $0x38] sm:$0xff]
        %v871 = vld [vmem:[#allocation7 + $0x40] sm:$0xff]
        %v872 = vld [vmem:[#allocation7 + $0x48] sm:$0xff]
        %v873 = vld [vmem:[#allocation7 + $0x50] sm:$0xff]
        %v874 = vld [vmem:[#allocation7 + $0x58] sm:$0xff]
        %v875 = vld [vmem:[#allocation7 + $0x60] sm:$0xff]
        %v876 = vld [vmem:[#allocation7 + $0x68] sm:$0xff]
        %v877 = vld [vmem:[#allocation7 + $0x70] sm:$0xff]
        %v878 = vld [vmem:[#allocation7 + $0x78] sm:$0xff]
        %v879 = vld [vmem:[%s10] sm:$0x1]
        %v881 = vlaneseq
        %v882 = vshrl.u32 %v881, 7
        %v883 = vsub.s32 0, %v882
        %v884 = vrot.slane %v879, %v883
        %886 = vmatprep.subr.mxu0 0.0
        %887 = vmatpush1.msra.mxu0 %v863
        %888 = vmatprep.subr.mxu0 0.0
        %889 = vmatpush1.msra.mxu0 %v864
        %890 = vmatprep.subr.mxu0 0.0
        %891 = vmatpush1.msra.mxu0 %v865
        %892 = vmatprep.subr.mxu0 0.0
        %893 = vmatpush1.msra.mxu0 %v866
        %894 = vmatprep.subr.mxu0 0.0
        %895 = vmatpush1.msra.mxu0 %v867
        %896 = vmatprep.subr.mxu0 0.0
        %897 = vmatpush1.msra.mxu0 %v868
        %898 = vmatprep.subr.mxu0 0.0
        %899 = vmatpush1.msra.mxu0 %v869
        %900 = vmatprep.subr.mxu0 0.0
        %901 = vmatpush1.msra.mxu0 %v870
        %902 = vmatprep.subr.mxu0 0.0
        %903 = vmatpush1.msra.mxu0 %v871
        %904 = vmatprep.subr.mxu0 0.0
        %905 = vmatpush1.msra.mxu0 %v872
        %906 = vmatprep.subr.mxu0 0.0
        %907 = vmatpush1.msra.mxu0 %v873
        %908 = vmatprep.subr.mxu0 0.0
        %909 = vmatpush1.msra.mxu0 %v874
        %910 = vmatprep.subr.mxu0 0.0
        %911 = vmatpush1.msra.mxu0 %v875
        %912 = vmatprep.subr.mxu0 0.0
        %913 = vmatpush1.msra.mxu0 %v876
        %914 = vmatprep.subr.mxu0 0.0
        %915 = vmatpush1.msra.mxu0 %v877
        %916 = vmatprep.subr.mxu0 0.0
        %917 = vmatpush1.msra.mxu0 %v878
        %918 = vmatprep.subr.mxu0 0.0
        %919 = vmatpush1.msra.mxu0 0.0
        %920 = vmatprep.subr.mxu0 0.0
        %921 = vmatpush1.msra.mxu0 0.0
        %922 = vmatprep.subr.mxu0 0.0
        %923 = vmatpush1.msra.mxu0 0.0
        %924 = vmatprep.subr.mxu0 0.0
        %925 = vmatpush1.msra.mxu0 0.0
        %926 = vmatprep.subr.mxu0 0.0
        %927 = vmatpush1.msra.mxu0 0.0
        %928 = vmatprep.subr.mxu0 0.0
        %929 = vmatpush1.msra.mxu0 0.0
        %930 = vmatprep.subr.mxu0 0.0
        %931 = vmatpush1.msra.mxu0 0.0
        %932 = vmatprep.subr.mxu0 0.0
        %933 = vmatpush1.msra.mxu0 0.0
        %934 = vmatprep.subr.mxu0 0.0
        %935 = vmatpush1.msra.mxu0 0.0
        %936 = vmatprep.subr.mxu0 0.0
        %937 = vmatpush1.msra.mxu0 0.0
        %938 = vmatprep.subr.mxu0 0.0
        %939 = vmatpush1.msra.mxu0 0.0
        %940 = vmatprep.subr.mxu0 0.0
        %941 = vmatpush1.msra.mxu0 0.0
        %942 = vmatprep.subr.mxu0 0.0
        %943 = vmatpush1.msra.mxu0 0.0
        %944 = vmatprep.subr.mxu0 0.0
        %945 = vmatpush1.msra.mxu0 0.0
        %946 = vmatprep.subr.mxu0 0.0
        %947 = vmatpush1.msra.mxu0 0.0
        %948 = vmatprep.subr.mxu0 0.0
        %949 = vmatpush1.msra.mxu0 0.0
        %950 = vmatprep.mubr.f32.mxu0 0.0
        %951 = vmatmul.mubr.f32.gmra.mrb[0].mxu0 %v859
        %v952 = vpop.f32.mrb[0].mxu0
        %v953 = vadd.f32 %v884, %v952
        %v954 = vpop.f32.mrb[0].mxu0
        %955 = vmatprep.mubr.f32.mxu0 0.0
        %956 = vmatmul.mubr.f32.gmra.mrb[0].mxu0 %v860
        %v957 = vpop.f32.mrb[0].mxu0
        %v958 = vadd.f32 %v884, %v957
        %v959 = vpop.f32.mrb[0].mxu0
        %960 = vmatprep.mubr.f32.mxu0 0.0
        %961 = vmatmul.mubr.f32.gmra.mrb[0].mxu0 %v861
        %v962 = vpop.f32.mrb[0].mxu0
        %v963 = vadd.f32 %v884, %v962
        %v964 = vpop.f32.mrb[0].mxu0
        %965 = vmatprep.mubr.f32.mxu0 0.0
        %966 = vmatmul.mubr.f32.gmra.mrb[0].mxu0 %v862
        %v967 = vpop.f32.mrb[0].mxu0
        %v968 = vadd.f32 %v884, %v967
        %v969 = vpop.f32.mrb[0].mxu0
        %970 = vdwg.mxu0
        %v971 = vmax.f32 %v953, 0.0
        %v972 = vmax.f32 %v958, 0.0
        %v973 = vmax.f32 %v963, 0.0
        %v974 = vmax.f32 %v968, 0.0
        %v975 = vld [vmem:[%s11] sm:$0xff]
        %v976 = vld [vmem:[%s11 + $0x8] sm:$0xff]
        %v977 = vld [vmem:[%s11 + $0x10] sm:$0xff]
        %v978 = vld [vmem:[%s11 + $0x18] sm:$0xff]
        %v979 = vld [vmem:[%s11 + $0x20] sm:$0xff]
        %v980 = vld [vmem:[%s11 + $0x28] sm:$0xff]
        %v981 = vld [vmem:[%s11 + $0x30] sm:$0xff]
        %v982 = vld [vmem:[%s11 + $0x38] sm:$0xff]
        %v983 = vld [vmem:[%s11 + $0x40] sm:$0xff]
        %v984 = vld [vmem:[%s11 + $0x48] sm:$0xff]
        %v985 = vld [vmem:[%s11 + $0x50] sm:$0xff]
        %v986 = vld [vmem:[%s11 + $0x58] sm:$0xff]
        %v987 = vld [vmem:[%s11 + $0x60] sm:$0xff]
        %v988 = vld [vmem:[%s11 + $0x68] sm:$0xff]
        %v989 = vld [vmem:[%s11 + $0x70] sm:$0xff]
        %v990 = vld [vmem:[%s11 + $0x78] sm:$0xff]
        %991 = vmatprep.subr.mxu0 0.0
        %992 = vmatpush1.msra.mxu0 %v975
        %993 = vmatprep.subr.mxu0 0.0
        %994 = vmatpush1.msra.mxu0 %v976
        %995 = vmatprep.subr.mxu0 0.0
        %996 = vmatpush1.msra.mxu0 %v977
        %997 = vmatprep.subr.mxu0 0.0
        %998 = vmatpush1.msra.mxu0 %v978
        %999 = vmatprep.subr.mxu0 0.0
        %1000 = vmatpush1.msra.mxu0 %v979
        %1001 = vmatprep.subr.mxu0 0.0
        %1002 = vmatpush1.msra.mxu0 %v980
        %1003 = vmatprep.subr.mxu0 0.0
        %1004 = vmatpush1.msra.mxu0 %v981
        %1005 = vmatprep.subr.mxu0 0.0
        %1006 = vmatpush1.msra.mxu0 %v982
        %1007 = vmatprep.subr.mxu0 0.0
        %1008 = vmatpush1.msra.mxu0 %v983
        %1009 = vmatprep.subr.mxu0 0.0
        %1010 = vmatpush1.msra.mxu0 %v984
        %1011 = vmatprep.subr.mxu0 0.0
        %1012 = vmatpush1.msra.mxu0 %v985
        %1013 = vmatprep.subr.mxu0 0.0
        %1014 = vmatpush1.msra.mxu0 %v986
        %1015 = vmatprep.subr.mxu0 0.0
        %1016 = vmatpush1.msra.mxu0 %v987
        %1017 = vmatprep.subr.mxu0 0.0
        %1018 = vmatpush1.msra.mxu0 %v988
        %1019 = vmatprep.subr.mxu0 0.0
        %1020 = vmatpush1.msra.mxu0 %v989
        %1021 = vmatprep.subr.mxu0 0.0
        %1022 = vmatpush1.msra.mxu0 %v990
        %1023 = vmatprep.subr.mxu0 0.0
        %1024 = vmatpush1.msra.mxu0 0.0
        %1025 = vmatprep.subr.mxu0 0.0
        %1026 = vmatpush1.msra.mxu0 0.0
        %1027 = vmatprep.subr.mxu0 0.0
        %1028 = vmatpush1.msra.mxu0 0.0
        %1029 = vmatprep.subr.mxu0 0.0
        %1030 = vmatpush1.msra.mxu0 0.0
        %1031 = vmatprep.subr.mxu0 0.0
        %1032 = vmatpush1.msra.mxu0 0.0
        %1033 = vmatprep.subr.mxu0 0.0
        %1034 = vmatpush1.msra.mxu0 0.0
        %1035 = vmatprep.subr.mxu0 0.0
        %1036 = vmatpush1.msra.mxu0 0.0
        %1037 = vmatprep.subr.mxu0 0.0
        %1038 = vmatpush1.msra.mxu0 0.0
        %1039 = vmatprep.subr.mxu0 0.0
        %1040 = vmatpush1.msra.mxu0 0.0
        %1041 = vmatprep.subr.mxu0 0.0
        %1042 = vmatpush1.msra.mxu0 0.0
        %1043 = vmatprep.subr.mxu0 0.0
        %1044 = vmatpush1.msra.mxu0 0.0
        %1045 = vmatprep.subr.mxu0 0.0
        %1046 = vmatpush1.msra.mxu0 0.0
        %1047 = vmatprep.subr.mxu0 0.0
        %1048 = vmatpush1.msra.mxu0 0.0
        %1049 = vmatprep.subr.mxu0 0.0
        %1050 = vmatpush1.msra.mxu0 0.0
        %1051 = vmatprep.subr.mxu0 0.0
        %1052 = vmatpush1.msra.mxu0 0.0
        %1053 = vmatprep.subr.mxu0 0.0
        %1054 = vmatpush1.msra.mxu0 0.0
        %1055 = vmatprep.mubr.f32.mxu0 0.0
        %1056 = vmatmul.mubr.f32.gmra.mrb[0].mxu0 %v971
        %v1057 = vpop.f32.mrb[0].mxu0
        %v1058 = vadd.f32 0.0, %v1057
        %v1059 = vpop.f32.mrb[0].mxu0
        %1060 = vmatprep.mubr.f32.mxu0 0.0
        %1061 = vmatmul.mubr.f32.gmra.mrb[0].mxu0 %v972
        %v1062 = vpop.f32.mrb[0].mxu0
        %v1063 = vadd.f32 0.0, %v1062
        %v1064 = vpop.f32.mrb[0].mxu0
        %1065 = vmatprep.mubr.f32.mxu0 0.0
        %1066 = vmatmul.mubr.f32.gmra.mrb[0].mxu0 %v973
        %v1067 = vpop.f32.mrb[0].mxu0
        %v1068 = vadd.f32 0.0, %v1067
        %v1069 = vpop.f32.mrb[0].mxu0
        %1070 = vmatprep.mubr.f32.mxu0 0.0
        %1071 = vmatmul.mubr.f32.gmra.mrb[0].mxu0 %v974
        %v1072 = vpop.f32.mrb[0].mxu0
        %v1073 = vadd.f32 0.0, %v1072
        %v1074 = vpop.f32.mrb[0].mxu0
        %1075 = vdwg.mxu0
        %v1076 = vld [vmem:[#allocation8] sm:$0xff]
        %v1077 = vld [vmem:[#allocation8 + $0x8] sm:$0xff]
        %v1078 = vld [vmem:[#allocation8 + $0x10] sm:$0xff]
        %v1079 = vld [vmem:[#allocation8 + $0x18] sm:$0xff]
        %v1080 = vld [vmem:[#allocation8 + $0x20] sm:$0xff]
        %v1081 = vld [vmem:[#allocation8 + $0x28] sm:$0xff]
        %v1082 = vld [vmem:[#allocation8 + $0x30] sm:$0xff]
        %v1083 = vld [vmem:[#allocation8 + $0x38] sm:$0xff]
        %v1084 = vld [vmem:[#allocation8 + $0x40] sm:$0xff]
        %v1085 = vld [vmem:[#allocation8 + $0x48] sm:$0xff]
        %v1086 = vld [vmem:[#allocation8 + $0x50] sm:$0xff]
        %v1087 = vld [vmem:[#allocation8 + $0x58] sm:$0xff]
        %v1088 = vld [vmem:[#allocation8 + $0x60] sm:$0xff]
        %v1089 = vld [vmem:[#allocation8 + $0x68] sm:$0xff]
        %v1090 = vld [vmem:[#allocation8 + $0x70] sm:$0xff]
        %v1091 = vld [vmem:[#allocation8 + $0x78] sm:$0xff]
        %v1092 = vlaneseq
        %v1093 = vand.u32 %v1092, 127
        %vm1094 = vcmp.eq.s32.totalorder %v1093, 33
        %v1095 = vsel %vm1094, 1, 0
        %v1096 = vcvt.s32.f32 %v1095
        %1097 = vmatprep.subr.mxu0 0.0
        %1098 = vmatpush1.msra.mxu0 %v1076
        %1099 = vmatprep.subr.mxu0 0.0
        %1100 = vmatpush1.msra.mxu0 %v1077
        %1101 = vmatprep.subr.mxu0 0.0
        %1102 = vmatpush1.msra.mxu0 %v1078
        %1103 = vmatprep.subr.mxu0 0.0
        %1104 = vmatpush1.msra.mxu0 %v1079
        %1105 = vmatprep.subr.mxu0 0.0
        %1106 = vmatpush1.msra.mxu0 %v1080
        %1107 = vmatprep.subr.mxu0 0.0
        %1108 = vmatpush1.msra.mxu0 %v1081
        %1109 = vmatprep.subr.mxu0 0.0
        %1110 = vmatpush1.msra.mxu0 %v1082
        %1111 = vmatprep.subr.mxu0 0.0
        %1112 = vmatpush1.msra.mxu0 %v1083
        %1113 = vmatprep.subr.mxu0 0.0
        %1114 = vmatpush1.msra.mxu0 %v1084
        %1115 = vmatprep.subr.mxu0 0.0
        %1116 = vmatpush1.msra.mxu0 %v1085
        %1117 = vmatprep.subr.mxu0 0.0
        %1118 = vmatpush1.msra.mxu0 %v1086
        %1119 = vmatprep.subr.mxu0 0.0
        %1120 = vmatpush1.msra.mxu0 %v1087
        %1121 = vmatprep.subr.mxu0 0.0
        %1122 = vmatpush1.msra.mxu0 %v1088
        %1123 = vmatprep.subr.mxu0 0.0
        %1124 = vmatpush1.msra.mxu0 %v1089
        %1125 = vmatprep.subr.mxu0 0.0
        %1126 = vmatpush1.msra.mxu0 %v1090
        %1127 = vmatprep.subr.mxu0 0.0
        %1128 = vmatpush1.msra.mxu0 %v1091
        %1129 = vmatprep.subr.mxu0 0.0
        %1130 = vmatpush1.msra.mxu0 0.0
        %1131 = vmatprep.subr.mxu0 0.0
        %1132 = vmatpush1.msra.mxu0 0.0
        %1133 = vmatprep.subr.mxu0 0.0
        %1134 = vmatpush1.msra.mxu0 0.0
        %1135 = vmatprep.subr.mxu0 0.0
        %1136 = vmatpush1.msra.mxu0 0.0
        %1137 = vmatprep.subr.mxu0 0.0
        %1138 = vmatpush1.msra.mxu0 0.0
        %1139 = vmatprep.subr.mxu0 0.0
        %1140 = vmatpush1.msra.mxu0 0.0
        %1141 = vmatprep.subr.mxu0 0.0
        %1142 = vmatpush1.msra.mxu0 0.0
        %1143 = vmatprep.subr.mxu0 0.0
        %1144 = vmatpush1.msra.mxu0 0.0
        %1145 = vmatprep.subr.mxu0 0.0
        %1146 = vmatpush1.msra.mxu0 0.0
        %1147 = vmatprep.subr.mxu0 0.0
        %1148 = vmatpush1.msra.mxu0 0.0
        %1149 = vmatprep.subr.mxu0 0.0
        %1150 = vmatpush1.msra.mxu0 0.0
        %1151 = vmatprep.subr.mxu0 0.0
        %1152 = vmatpush1.msra.mxu0 0.0
        %1153 = vmatprep.subr.mxu0 0.0
        %1154 = vmatpush1.msra.mxu0 0.0
        %1155 = vmatprep.subr.mxu0 0.0
        %1156 = vmatpush1.msra.mxu0 0.0
        %1157 = vmatprep.subr.mxu0 0.0
        %1158 = vmatpush1.msra.mxu0 0.0
        %1159 = vmatprep.subr.mxu0 0.0
        %1160 = vmatpush1.msra.mxu0 0.0
        %1161 = vmatprep.mubr.f32.mxu0 0.0
        %1162 = vmatmul.mubr.f32.gmra.mrb[0].mxu0 %v750
        %v1163 = vpop.f32.mrb[0].mxu0
        %v1164 = vadd.f32 %v1096, %v1163
        %v1165 = vpop.f32.mrb[0].mxu0
        %1166 = vdwg.mxu0
        %1167 = vset.pattern.permute.xlu0 0
        %1168 = vperm.xlu0 %1167, %v648
        %v1169 = vpop.permute.xlu0 %1168
        %1170 = vset.pattern.permute.xlu0 0
        %1171 = vperm.xlu0 %1170, %v649
        %v1172 = vpop.permute.xlu0 %1171
        %1173 = vset.pattern.permute.xlu0 0
        %1174 = vperm.xlu0 %1173, %v650
        %v1175 = vpop.permute.xlu0 %1174
        %1176 = vset.pattern.permute.xlu0 0
        %1177 = vperm.xlu0 %1176, %v651
        %v1178 = vpop.permute.xlu0 %1177
        %vm1179 = vcmp.eq.s32.totalorder %v1169, %v1093
        %vm1180 = vcmp.eq.s32.totalorder %v1172, %v1093
        %vm1181 = vcmp.eq.s32.totalorder %v1175, %v1093
        %vm1182 = vcmp.eq.s32.totalorder %v1178, %v1093
        %v1183 = vsel %vm1179, 1, 0
        %v1184 = vsel %vm1180, 1, 0
        %v1185 = vsel %vm1181, 1, 0
        %v1186 = vsel %vm1182, 1, 0
        %v1187 = vcvt.s32.f32 %v1183
        %v1188 = vcvt.s32.f32 %v1184
        %v1189 = vcvt.s32.f32 %v1185
        %v1190 = vcvt.s32.f32 %v1186
        %v1191 = vpack.c.bf16 %v1188, %v1187
        %v1192 = vpack.c.bf16 %v1190, %v1189
        %1193 = vset.pattern.permute.xlu0 0
        %1194 = vperm.xlu0 %1193, %v652
        %v1195 = vpop.permute.xlu0 %1194
        %1196 = vset.pattern.permute.xlu0 0
        %1197 = vperm.xlu0 %1196, %v653
        %v1198 = vpop.permute.xlu0 %1197
        %1199 = vset.pattern.permute.xlu0 0
        %1200 = vperm.xlu0 %1199, %v654
        %v1201 = vpop.permute.xlu0 %1200
        %1202 = vset.pattern.permute.xlu0 0
        %1203 = vperm.xlu0 %1202, %v655
        %v1204 = vpop.permute.xlu0 %1203
        %vm1205 = vcmp.eq.s32.totalorder %v1195, %v1093
        %vm1206 = vcmp.eq.s32.totalorder %v1198, %v1093
        %vm1207 = vcmp.eq.s32.totalorder %v1201, %v1093
        %vm1208 = vcmp.eq.s32.totalorder %v1204, %v1093
        %v1209 = vsel %vm1205, 1, 0
        %v1210 = vsel %vm1206, 1, 0
        %v1211 = vsel %vm1207, 1, 0
        %v1212 = vsel %vm1208, 1, 0
        %v1213 = vcvt.s32.f32 %v1209
        %v1214 = vcvt.s32.f32 %v1210
        %v1215 = vcvt.s32.f32 %v1211
        %v1216 = vcvt.s32.f32 %v1212
        %v1217 = vlaneseq
        %v1218 = vshrl.u32 %v1217, 7
        %v1219 = vlaneseq
        %v1220 = vshrl.u32 %v1219, 7
        %v1221 = vsub.s32 0, %v1220
        %v1222 = vrot.slane %v656, %v1221
        %vm1223 = vcmp.eq.s32.totalorder %v1218, %v1222
        %v1224 = vsel %vm1223, 1, 0
        %v1225 = vcvt.s32.f32 %v1224
        %v1226 = vpack.c.bf16 %v1225, %v1225
        %v1227 = vpack.c.bf16 %v1164, %v1164
        %vm1228 = vcmask 64512
        %v1230 = vsel %vm1228, %v1191, 0
        %v1233 = vsel %vm1228, %v1192, 0
        %vm1235 = vcmask 1043456
        %v1237 = vsel %vm1235, %v1227, 0
        %1239 = vmatprep.subr.bf16.mxu0 0
        %1240 = vmatpush1.bf16.msra.mxu0 %v1237
        %1241 = vmatprep.subr.bf16.mxu0 0
        %1242 = vmatpush1.bf16.msra.mxu0 0
        %1243 = vmatprep.subr.bf16.mxu0 0
        %1244 = vmatpush1.bf16.msra.mxu0 0
        %1245 = vmatprep.subr.bf16.mxu0 0
        %1246 = vmatpush1.bf16.msra.mxu0 0
        %1247 = vmatprep.subr.bf16.mxu0 0
        %1248 = vmatpush1.bf16.msra.mxu0 0
        %1249 = vmatprep.subr.bf16.mxu0 0
        %1250 = vmatpush1.bf16.msra.mxu0 0
        %1251 = vmatprep.subr.bf16.mxu0 0
        %1252 = vmatpush1.bf16.msra.mxu0 0
        %1253 = vmatprep.subr.bf16.mxu0 0
        %1254 = vmatpush1.bf16.msra.mxu0 0
        %1255 = vmatprep.subr.bf16.mxu0 0
        %1256 = vmatpush1.bf16.msra.mxu0 0
        %1257 = vmatprep.subr.bf16.mxu0 0
        %1258 = vmatpush1.bf16.msra.mxu0 0
        %1259 = vmatprep.subr.bf16.mxu0 0
        %1260 = vmatpush1.bf16.msra.mxu0 0
        %1261 = vmatprep.subr.bf16.mxu0 0
        %1262 = vmatpush1.bf16.msra.mxu0 0
        %1263 = vmatprep.subr.bf16.mxu0 0
        %1264 = vmatpush1.bf16.msra.mxu0 0
        %1265 = vmatprep.subr.bf16.mxu0 0
        %1266 = vmatpush1.bf16.msra.mxu0 0
        %1267 = vmatprep.subr.bf16.mxu0 0
        %1268 = vmatpush1.bf16.msra.mxu0 0
        %1269 = vmatprep.subr.bf16.mxu0 0
        %1270 = vmatpush1.bf16.msra.mxu0 0
        %1271 = vmatprep.mubr.bf16.mxu0 0
        %1272 = vmatmul.mubr.bf16.gmra.mrb[0].mxu0 %v1230
        %v1273 = vpop.f32.mrb[0].mxu0
        %v1274 = vadd.f32 0.0, %v1273
        %v1275 = vpop.f32.mrb[0].mxu0
        %v1276 = vpop.f32.mrb[0].mxu0
        %v1277 = vadd.f32 0.0, %v1276
        %v1278 = vpop.f32.mrb[0].mxu0
        %1279 = vmatprep.mubr.bf16.mxu0 0
        %1280 = vmatmul.mubr.bf16.gmra.mrb[0].mxu0 %v1233
        %v1281 = vpop.f32.mrb[0].mxu0
        %v1282 = vadd.f32 0.0, %v1281
        %v1283 = vpop.f32.mrb[0].mxu0
        %v1284 = vpop.f32.mrb[0].mxu0
        %v1285 = vadd.f32 0.0, %v1284
        %v1286 = vpop.f32.mrb[0].mxu0
        %1287 = vdwg.mxu0
        %1289 = vrot.lane.b32.xlu0 %v1164, 94
        %v1290 = vpop.permute.xlu0 %1289
        %v1293 = vsel %vm1228, %v1213, 0
        %v1296 = vsel %vm1228, %v1214, 0
        %v1299 = vsel %vm1228, %v1215, 0
        %v1302 = vsel %vm1228, %v1216, 0
        %1304 = vmatprep.subr.mxu0 0.0
        %1305 = vmatpush1.msra.mxu0 %v1290
        %1306 = vmatprep.subr.mxu0 0.0
        %1307 = vmatpush1.msra.mxu0 0.0
        %1308 = vmatprep.subr.mxu0 0.0
        %1309 = vmatpush1.msra.mxu0 0.0
        %1310 = vmatprep.subr.mxu0 0.0
        %1311 = vmatpush1.msra.mxu0 0.0
        %1312 = vmatprep.subr.mxu0 0.0
        %1313 = vmatpush1.msra.mxu0 0.0
        %1314 = vmatprep.subr.mxu0 0.0
        %1315 = vmatpush1.msra.mxu0 0.0
        %1316 = vmatprep.subr.mxu0 0.0
        %1317 = vmatpush1.msra.mxu0 0.0
        %1318 = vmatprep.subr.mxu0 0.0
        %1319 = vmatpush1.msra.mxu0 0.0
        %1320 = vmatprep.subr.mxu0 0.0
        %1321 = vmatpush1.msra.mxu0 0.0
        %1322 = vmatprep.subr.mxu0 0.0
        %1323 = vmatpush1.msra.mxu0 0.0
        %1324 = vmatprep.subr.mxu0 0.0
        %1325 = vmatpush1.msra.mxu0 0.0
        %1326 = vmatprep.subr.mxu0 0.0
        %1327 = vmatpush1.msra.mxu0 0.0
        %1328 = vmatprep.subr.mxu0 0.0
        %1329 = vmatpush1.msra.mxu0 0.0
        %1330 = vmatprep.subr.mxu0 0.0
        %1331 = vmatpush1.msra.mxu0 0.0
        %1332 = vmatprep.subr.mxu0 0.0
        %1333 = vmatpush1.msra.mxu0 0.0
        %1334 = vmatprep.subr.mxu0 0.0
        %1335 = vmatpush1.msra.mxu0 0.0
        %1336 = vmatprep.subr.mxu0 0.0
        %1337 = vmatpush1.msra.mxu0 0.0
        %1338 = vmatprep.subr.mxu0 0.0
        %1339 = vmatpush1.msra.mxu0 0.0
        %1340 = vmatprep.subr.mxu0 0.0
        %1341 = vmatpush1.msra.mxu0 0.0
        %1342 = vmatprep.subr.mxu0 0.0
        %1343 = vmatpush1.msra.mxu0 0.0
        %1344 = vmatprep.subr.mxu0 0.0
        %1345 = vmatpush1.msra.mxu0 0.0
        %1346 = vmatprep.subr.mxu0 0.0
        %1347 = vmatpush1.msra.mxu0 0.0
        %1348 = vmatprep.subr.mxu0 0.0
        %1349 = vmatpush1.msra.mxu0 0.0
        %1350 = vmatprep.subr.mxu0 0.0
        %1351 = vmatpush1.msra.mxu0 0.0
        %1352 = vmatprep.subr.mxu0 0.0
        %1353 = vmatpush1.msra.mxu0 0.0
        %1354 = vmatprep.subr.mxu0 0.0
        %1355 = vmatpush1.msra.mxu0 0.0
        %1356 = vmatprep.subr.mxu0 0.0
        %1357 = vmatpush1.msra.mxu0 0.0
        %1358 = vmatprep.subr.mxu0 0.0
        %1359 = vmatpush1.msra.mxu0 0.0
        %1360 = vmatprep.subr.mxu0 0.0
        %1361 = vmatpush1.msra.mxu0 0.0
        %1362 = vmatprep.subr.mxu0 0.0
        %1363 = vmatpush1.msra.mxu0 0.0
        %1364 = vmatprep.subr.mxu0 0.0
        %1365 = vmatpush1.msra.mxu0 0.0
        %1366 = vmatprep.subr.mxu0 0.0
        %1367 = vmatpush1.msra.mxu0 0.0
        %1368 = vmatprep.mubr.f32.mxu0 0.0
        %1369 = vmatmul.mubr.f32.gmra.mrb[0].mxu0 %v1293
        %v1370 = vpop.f32.mrb[0].mxu0
        %v1371 = vadd.f32 0.0, %v1370
        %v1372 = vpop.f32.mrb[0].mxu0
        %1373 = vmatprep.mubr.f32.mxu0 0.0
        %1374 = vmatmul.mubr.f32.gmra.mrb[0].mxu0 %v1296
        %v1375 = vpop.f32.mrb[0].mxu0
        %v1376 = vadd.f32 0.0, %v1375
        %v1377 = vpop.f32.mrb[0].mxu0
        %1378 = vmatprep.mubr.f32.mxu0 0.0
        %1379 = vmatmul.mubr.f32.gmra.mrb[0].mxu0 %v1299
        %v1380 = vpop.f32.mrb[0].mxu0
        %v1381 = vadd.f32 0.0, %v1380
        %v1382 = vpop.f32.mrb[0].mxu0
        %1383 = vmatprep.mubr.f32.mxu0 0.0
        %1384 = vmatmul.mubr.f32.gmra.mrb[0].mxu0 %v1302
        %v1385 = vpop.f32.mrb[0].mxu0
        %v1386 = vadd.f32 0.0, %v1385
        %v1387 = vpop.f32.mrb[0].mxu0
        %1388 = vdwg.mxu0
        %1393 = vrot.lane.b32.xlu0 %v1371, 32
        %v1394 = vpop.permute.xlu0 %1393
        %1395 = vrot.lane.b32.xlu0 %v1376, 32
        %v1396 = vpop.permute.xlu0 %1395
        %1397 = vrot.lane.b32.xlu0 %v1381, 32
        %v1398 = vpop.permute.xlu0 %1397
        %1399 = vrot.lane.b32.xlu0 %v1386, 32
        %v1400 = vpop.permute.xlu0 %1399
        %v1405 = vadd.f32 %v1274, %v1394
        %v1406 = vadd.f32 %v1277, %v1396
        %v1407 = vadd.f32 %v1282, %v1398
        %v1408 = vadd.f32 %v1285, %v1400
        %1413 = vrot.lane.b32.xlu0 %v1058, 32
        %v1414 = vpop.permute.xlu0 %1413
        %1415 = vrot.lane.b32.xlu0 %v1063, 32
        %v1416 = vpop.permute.xlu0 %1415
        %1417 = vrot.lane.b32.xlu0 %v1068, 32
        %v1418 = vpop.permute.xlu0 %1417
        %1419 = vrot.lane.b32.xlu0 %v1073, 32
        %v1420 = vpop.permute.xlu0 %1419
        %v1425 = vadd.f32 %v1405, %v1414
        %v1426 = vadd.f32 %v1406, %v1416
        %v1427 = vadd.f32 %v1407, %v1418
        %v1428 = vadd.f32 %v1408, %v1420
        %vm1429 = vcmp.gt.f32.partialorder %v1425, 0.0
        %vm1430 = vcmp.gt.f32.partialorder %v1426, 0.0
        %vm1431 = vcmp.gt.f32.partialorder %v1427, 0.0
        %vm1432 = vcmp.gt.f32.partialorder %v1428, 0.0
        %v1433 = vmul.f32 %v1425, 0.2
        %v1434 = vmul.f32 %v1426, 0.2
        %v1435 = vmul.f32 %v1427, 0.2
        %v1436 = vmul.f32 %v1428, 0.2
        %v1437 = vsel %vm1429, %v1425, %v1433
        %v1438 = vsel %vm1430, %v1426, %v1434
        %v1439 = vsel %vm1431, %v1427, %v1435
        %v1440 = vsel %vm1432, %v1428, %v1436
        %vm1441 = vcmp.ge.s32.totalorder %v648, 0
        %vm1442 = vcmp.ge.s32.totalorder %v649, 0
        %vm1443 = vcmp.ge.s32.totalorder %v650, 0
        %vm1444 = vcmp.ge.s32.totalorder %v651, 0
        %1449 = vrot.lane.b32.xlu0 %v1437, 96
        %v1450 = vpop.permute.xlu0 %1449
        %1451 = vrot.lane.b32.xlu0 %v1438, 96
        %v1452 = vpop.permute.xlu0 %1451
        %1453 = vrot.lane.b32.xlu0 %v1439, 96
        %v1454 = vpop.permute.xlu0 %1453
        %1455 = vrot.lane.b32.xlu0 %v1440, 96
        %v1456 = vpop.permute.xlu0 %1455
        %v1461 = vsel %vm1441, %v1450, -1e+30
        %v1462 = vsel %vm1442, %v1452, -1e+30
        %v1463 = vsel %vm1443, %v1454, -1e+30
        %v1464 = vsel %vm1444, %v1456, -1e+30
        %vm1465 = vcmask 7168
        %v1466 = vsel %vm1465, %v1461, -inf
        %v1467 = vsel %vm1465, %v1462, -inf
        %v1468 = vsel %vm1465, %v1463, -inf
        %v1469 = vsel %vm1465, %v1464, -inf
        %v1470 = vmax.f32 %v1466, %v1467
        %v1471 = vmax.f32 %v1468, %v1469
        %v1472 = vmax.f32 %v1470, %v1471
        %1473 = vmax.xlane.f32.xlu0 %v1472
        %v1474 = vpop.xlane.xlu0 %1473
        %v1475 = vrot.slane %v1474, 4
        %v1476 = vmax.f32 %v1474, %v1475
        %v1477 = vrot.slane %v1476, 2
        %v1478 = vmax.f32 %v1476, %v1477
        %v1479 = vrot.slane %v1478, 1
        %v1480 = vmax.f32 %v1478, %v1479
        %s1481 = vtos %v1480
        %v1482 = vstv %s1481
        %v1483 = vsub.f32 %v1461, %v1482
        %v1484 = vsub.f32 %v1462, %v1482
        %v1485 = vsub.f32 %v1463, %v1482
        %v1486 = vsub.f32 %v1464, %v1482
        %v1487 = vmul.f32 %v1483, 1.442695
        %v1488 = vpow.pop %v1487
        %v1489 = vmul.f32 %v1484, 1.442695
        %v1490 = vpow.pop %v1489
        %v1491 = vmul.f32 %v1485, 1.442695
        %v1492 = vpow.pop %v1491
        %v1493 = vmul.f32 %v1486, 1.442695
        %v1494 = vpow.pop %v1493
        %1496 = vset.pattern.permute.xlu0 0
        %1497 = vperm.xlu0 %1496, %v1488
        %v1498 = vpop.permute.xlu0 %1497
        %1501 = vset.pattern.permute.xlu0 0
        %1502 = vperm.xlu0 %1501, %v1490
        %v1503 = vpop.permute.xlu0 %1502
        %1506 = vset.pattern.permute.xlu0 0
        %1507 = vperm.xlu0 %1506, %v1492
        %v1508 = vpop.permute.xlu0 %1507
        %1511 = vset.pattern.permute.xlu0 0
        %1512 = vperm.xlu0 %1511, %v1494
        %v1513 = vpop.permute.xlu0 %1512
        %v1515 = vmul.f32 %v1498, %v1274
        %v1516 = vmul.f32 %v1503, %v1277
        %v1517 = vmul.f32 %v1508, %v1282
        %v1518 = vmul.f32 %v1513, %v1285
        %v1519 = vpack.c.bf16 %v1516, %v1515
        %v1520 = vpack.c.bf16 %v1518, %v1517
        %vm1521 = vcmask 261120
        %v1523 = vsel %vm1521, %v1226, 0
        %1525 = vmatprep.subr.bf16.mxu0 0
        %1526 = vmatpush1.bf16.msra.mxu0 %v1519
        %1527 = vmatprep.subr.bf16.mxu0 0
        %1528 = vmatpush1.bf16.msra.mxu0 %v1520
        %1529 = vmatprep.subr.bf16.mxu0 0
        %1530 = vmatpush1.bf16.msra.mxu0 0
        %1531 = vmatprep.subr.bf16.mxu0 0
        %1532 = vmatpush1.bf16.msra.mxu0 0
        %1533 = vmatprep.subr.bf16.mxu0 0
        %1534 = vmatpush1.bf16.msra.mxu0 0
        %1535 = vmatprep.subr.bf16.mxu0 0
        %1536 = vmatpush1.bf16.msra.mxu0 0
        %1537 = vmatprep.subr.bf16.mxu0 0
        %1538 = vmatpush1.bf16.msra.mxu0 0
        %1539 = vmatprep.subr.bf16.mxu0 0
        %1540 = vmatpush1.bf16.msra.mxu0 0
        %1541 = vmatprep.subr.bf16.mxu0 0
        %1542 = vmatpush1.bf16.msra.mxu0 0
        %1543 = vmatprep.subr.bf16.mxu0 0
        %1544 = vmatpush1.bf16.msra.mxu0 0
        %1545 = vmatprep.subr.bf16.mxu0 0
        %1546 = vmatpush1.bf16.msra.mxu0 0
        %1547 = vmatprep.subr.bf16.mxu0 0
        %1548 = vmatpush1.bf16.msra.mxu0 0
        %1549 = vmatprep.subr.bf16.mxu0 0
        %1550 = vmatpush1.bf16.msra.mxu0 0
        %1551 = vmatprep.subr.bf16.mxu0 0
        %1552 = vmatpush1.bf16.msra.mxu0 0
        %1553 = vmatprep.subr.bf16.mxu0 0
        %1554 = vmatpush1.bf16.msra.mxu0 0
        %1555 = vmatprep.subr.bf16.mxu0 0
        %1556 = vmatpush1.bf16.msra.mxu0 0
        %1557 = vmatprep.mubr.bf16.mxu0 0
        %1558 = vmatmul.mubr.bf16.gmra.mrb[0].mxu0 %v1523
        %v1559 = vpop.f32.mrb[0].mxu0
        %v1560 = vadd.f32 0.0, %v1559
        %v1561 = vpop.f32.mrb[0].mxu0
        %v1562 = vpop.f32.mrb[0].mxu0
        %v1563 = vpop.f32.mrb[0].mxu0
        %1564 = vdwg.mxu0
        %vm1565 = vcmp.gt.f32.partialorder %v1560, 0.0
        %v1566 = vsel %vm1565, %v1560, 1.0
        %v1567 = vrcp.pop %v1566
        %1569 = vset.pattern.permute.xlu0 33
        %1570 = vperm.xlu0 %1569, %v1567
        %v1571 = vpop.permute.xlu0 %1570
        %v1573 = vmul.f32 %v1560, %v1571
        %v1574 = vld [vmem:[%s13] sm:$0x1]
        %v1576 = vlaneseq
        %v1577 = vshrl.u32 %v1576, 7
        %v1578 = vsub.s32 0, %v1577
        %v1579 = vrot.slane %v1574, %v1578
        %v1581 = vadd.f32 %v1573, %v1579
        %1582 = vst [vmem:[%s622] sm:$0x1] %v1581
        %v1583 = vrot.slane %v1581, 4
        %v1584 = vadd.f32 %v1581, %v1583
        %v1585 = vrot.slane %v1584, 2
        %v1586 = vadd.f32 %v1584, %v1585
        %v1587 = vrot.slane %v1586, 1
        %v1588 = vadd.f32 %v1586, %v1587
        %v1589 = vmul.f32 %v1588, 0.125
        %1590 = vst [vmem:[%s628] sm:$0x1] %v1589
        %s1591 = sand.u32 %s367, 1
        %s1592 = scalar_lea.sflag [#allocation4], %s1591
        %s1593 = sand.u32 %s367, 1
        %s1594 = scalar_lea.vmem [#allocation10], %s1593
        %s1595 = sand.u32 %s393, 1
        %s1596 = scalar_lea.sflag [#allocation12], %s1595
        %s1597 = sand.u32 %s393, 1
        %s1598 = scalar_lea.vmem [#allocation11], %s1597
        // Predicated region
        $region93: #{tpu_custom_call.1} parent=75 // pred_check
          %p1599 = pneg %p377
        $region94: #{tpu_custom_call.1} parent=75 // pred_check_branch
          %1601 = sbr.rel (%p1599) target = $region96
        $region95: #{tpu_custom_call.1} parent=75 // pred_region
          %s1603 = ssub.s32 16, 16
          %1604 = vsyncadd %s1592, %s1603
          %s1605 = smul.addr %s40, 16
          %s1606 = scalar_lea.hbm %s14, %s1605
          %s1608 = sshll.u32 %s1594, 4
          %s1609 = int_to_ptr.vmem [resolvable:$true] %s1608
          %1611 = dma.vmem_to_hbm [thread:$0]  %s1609, 16, %s1606, %s1592
        $region96: #{tpu_custom_call.1} parent=75 // pred_fallthru
          _
        // Predicated region
        $region97: #{tpu_custom_call.1} parent=75 // pred_check
          %p1612 = pneg %p403
        $region98: #{tpu_custom_call.1} parent=75 // pred_check_branch
          %1614 = sbr.rel (%p1612) target = $region100
        $region99: #{tpu_custom_call.1} parent=75 // pred_region
          %s1616 = ssub.s32 16, 16
          %1617 = vsyncadd %s1596, %s1616
          %s1618 = smul.addr %s40, 16
          %s1619 = scalar_lea.hbm %s15, %s1618
          %s1621 = sshll.u32 %s1598, 4
          %s1622 = int_to_ptr.vmem [resolvable:$true] %s1621
          %1624 = dma.vmem_to_hbm [thread:$0]  %s1622, 16, %s1619, %s1596
        $region100: #{tpu_custom_call.1} parent=75 // pred_fallthru
          _
      $region76: #{tpu_custom_call.1} parent=5 // pred_fallthru
        _
      %p1625 = scmp.le.s32.totalorder 2, %s35
      // Predicated region
      $region101: #{tpu_custom_call.1} parent=5 // pred_check
        %p1626 = pneg %p1625
      $region102: #{tpu_custom_call.1} parent=5 // pred_check_branch
        %1628 = sbr.rel (%p1626) target = $region104
      $region103: #{tpu_custom_call.1} parent=5 // pred_region
        %s1629 = ssub.s32 %s35, 2
        // Predicated region
        $region105: #{tpu_custom_call.1} parent=103 // pred_check
          %p1630 = pneg %p383
        $region106: #{tpu_custom_call.1} parent=103 // pred_check_branch
          %1632 = sbr.rel (%p1630) target = $region108
        $region107: #{tpu_custom_call.1} parent=103 // pred_region
          %s1633 = sand.u32 %s368, 1
          %s1634 = scalar_lea.sflag [#allocation4], %s1633
          %s1635 = sand.u32 %s368, 1
          %s1636 = scalar_lea.vmem [#allocation10], %s1635
          %1637 = dma.done %s1634, 16
        $region108: #{tpu_custom_call.1} parent=103 // pred_fallthru
          _
        // Predicated region
        $region109: #{tpu_custom_call.1} parent=103 // pred_check
          %p1638 = pneg %p409
        $region110: #{tpu_custom_call.1} parent=103 // pred_check_branch
          %1640 = sbr.rel (%p1638) target = $region112
        $region111: #{tpu_custom_call.1} parent=103 // pred_region
          %s1641 = sand.u32 %s394, 1
          %s1642 = scalar_lea.sflag [#allocation12], %s1641
          %s1643 = sand.u32 %s394, 1
          %s1644 = scalar_lea.vmem [#allocation11], %s1643
          %1645 = dma.done %s1642, 16
        $region112: #{tpu_custom_call.1} parent=103 // pred_fallthru
          _
      $region104: #{tpu_custom_call.1} parent=5 // pred_fallthru
        _
    $region6: #{tpu_custom_call.1} parent=1 // loop_footer
      %s39 = sadd.s32 1, %s35
    $region7: #{tpu_custom_call.1} parent=1 // loop_footer_branch
      %34 = sbr.rel target = $region3
    $region8: #{tpu_custom_call.1} parent=1 // loop_exit
      _
    %1646 = vsyncpa [#allocation3], 1
    %s1647 = scalar_lea.sflag [#allocation3], 1
    %1648 = vsyncpa %s1647, 1
    %1649 = vsyncpa [#allocation6], 1
    %s1650 = scalar_lea.sflag [#allocation6], 1
    %1651 = vsyncpa %s1650, 1
    %1652 = vsyncpa [#allocation9], 1
    %1653 = vsyncpa [#allocation4], 1
    %s1654 = scalar_lea.sflag [#allocation4], 1
    %1655 = vsyncpa %s1654, 1
    %1656 = vsyncpa [#allocation12], 1
    %s1657 = scalar_lea.sflag [#allocation12], 1
    %1658 = vsyncpa %s1657, 1

</llo_original>
